<compile_context>
chip_gen: v5e
topology: v5e:2x2
jax: 0.10.0
libtpu: 0.0.40
codegen_flags: <defaults>
</compile_context>

<pallas_src>
import functools

import jax
import jax.numpy as jnp
from jax.experimental import pallas as pl
from jax.experimental.pallas import tpu as pltpu

EPS = 1e-5

# Ample for the few-10s-of-KB per-step blocks (double-buffered) and within every
# generation's physical VMEM (v7x: 64 MiB).
VMEM_LIMIT = 32 * 1024 * 1024

# MXU operand dtype. jnp.bfloat16 is the right choice on v6e/v7x (bf16-native MXU,
# halves matmul-operand traffic); f32 accumulation is kept either way.
MATMUL_DTYPE = jnp.float32


# ---------------------------------------------------------------------------
# Shared in-kernel helpers
# ---------------------------------------------------------------------------
def _conv3x3(a, w_ref, mask_ref, W):
    """3x3 'same' conv on a pixels-on-lanes slab.

    a        : (Cin, HW)  activation for one image, pixels flat on lanes.
    w_ref    : (9, Cout, Cin) taps, k = (dy+1)*3 + (dx+1).
    mask_ref : (9, HW) 0/1 border masks (also kill the lane-roll wrap-around).
    Returns (Cout, HW) f32.
    """
    _, HW = a.shape
    Cout = w_ref.shape[1]
    acc = jnp.zeros((Cout, HW), jnp.float32)
    for k in range(9):
        dy = k // 3 - 1
        dx = k % 3 - 1
        if dy == 0 and dx == 0:
            tap = a                                   # centre tap: no shift, no mask
        else:
            shift = (-(dy * W + dx)) % HW             # out[p] = a[p + dy*W + dx]
            tap = pltpu.roll(a, shift, axis=1) * mask_ref[k:k + 1, :]
        acc = acc + jnp.dot(w_ref[k].astype(MATMUL_DTYPE),
                            tap.astype(MATMUL_DTYPE),
                            preferred_element_type=jnp.float32)
    return acc


def _write_moments(mom_ref, acc):
    """Pack per-image BN partial moments (sum, sum of squares) into one output.

    mom_ref : (1, 2*Cout, 1); rows [0:Cout) = sum, rows [Cout:2*Cout) = sum(x^2).
    Both stores are sublane-aligned (offsets 0 and Cout=8).
    """
    Cout = acc.shape[0]
    mom_ref[0, 0:Cout, :] = jnp.sum(acc, axis=1, keepdims=True)
    mom_ref[0, Cout:2 * Cout, :] = jnp.sum(acc * acc, axis=1, keepdims=True)


# ---------------------------------------------------------------------------
# Kernel A: conv1 + per-image BN1 partial moments
# ---------------------------------------------------------------------------
def conv_moments_kernel(x_ref, w_ref, mask_ref, y_ref, mom_ref, *, W):
    acc = _conv3x3(x_ref[0], w_ref, mask_ref, W)
    y_ref[0] = acc
    _write_moments(mom_ref, acc)


def _conv_moments(x, w9, masks, W):
    N, Cin, HW = x.shape
    Cout = w9.shape[1]
    kern = functools.partial(conv_moments_kernel, W=W)
    return pl.pallas_call(
        kern,
        grid=(N,),
        in_specs=[
            pl.BlockSpec((1, Cin, HW), lambda n: (n, 0, 0)),
            pl.BlockSpec((9, Cout, Cin), lambda n: (0, 0, 0)),
            pl.BlockSpec((9, HW), lambda n: (0, 0)),
        ],
        out_specs=[
            pl.BlockSpec((1, Cout, HW), lambda n: (n, 0, 0)),
            pl.BlockSpec((1, 2 * Cout, 1), lambda n: (n, 0, 0)),
        ],
        out_shape=[
            jax.ShapeDtypeStruct((N, Cout, HW), jnp.float32),
            jax.ShapeDtypeStruct((N, 2 * Cout, 1), jnp.float32),
        ],
        compiler_params=pltpu.CompilerParams(
            dimension_semantics=("parallel",),          # both TCs on v7x
            vmem_limit_bytes=VMEM_LIMIT),
    )(x, w9, masks)


# ---------------------------------------------------------------------------
# Kernel B: BN1+ReLU1 (fused, VMEM-only intermediate) + conv2 + BN2 moments
# ---------------------------------------------------------------------------
def bn_relu_conv_moments_kernel(y1_ref, sc_ref, sh_ref, w_ref, mask_ref,
                                y2_ref, mom_ref, *, W):
    # BN1 + ReLU1: (C1, HW) slab times per-channel (C1, 1) scale/shift; the
    # normalized activation never leaves VMEM.
    a = jnp.maximum(y1_ref[0] * sc_ref[...] + sh_ref[...], 0.0)
    acc = _conv3x3(a, w_ref, mask_ref, W)
    y2_ref[0] = acc
    _write_moments(mom_ref, acc)


def _bn_relu_conv_moments(y1, sc, sh, w9, masks, W):
    N, C1, HW = y1.shape
    Cout = w9.shape[1]
    kern = functools.partial(bn_relu_conv_moments_kernel, W=W)
    return pl.pallas_call(
        kern,
        grid=(N,),
        in_specs=[
            pl.BlockSpec((1, C1, HW), lambda n: (n, 0, 0)),
            pl.BlockSpec((C1, 1), lambda n: (0, 0)),
            pl.BlockSpec((C1, 1), lambda n: (0, 0)),
            pl.BlockSpec((9, Cout, C1), lambda n: (0, 0, 0)),
            pl.BlockSpec((9, HW), lambda n: (0, 0)),
        ],
        out_specs=[
            pl.BlockSpec((1, Cout, HW), lambda n: (n, 0, 0)),
            pl.BlockSpec((1, 2 * Cout, 1), lambda n: (n, 0, 0)),
        ],
        out_shape=[
            jax.ShapeDtypeStruct((N, Cout, HW), jnp.float32),
            jax.ShapeDtypeStruct((N, 2 * Cout, 1), jnp.float32),
        ],
        compiler_params=pltpu.CompilerParams(
            dimension_semantics=("parallel",),
            vmem_limit_bytes=VMEM_LIMIT),
    )(y1, sc, sh, w9, masks)


# ---------------------------------------------------------------------------
# Kernel C: BN2 + ReLU2 on a lane-dense (C, HW) slab per image
# ---------------------------------------------------------------------------
def bn_relu_kernel(y_ref, sc_ref, sh_ref, o_ref):
    # (C, HW) * (C, 1) -> lane broadcast of per-sublane scalars (free on the VPU).
    o_ref[0] = jnp.maximum(y_ref[0] * sc_ref[...] + sh_ref[...], 0.0)


def _bn_relu_apply(y, sc, sh):
    N, C, HW = y.shape
    return pl.pallas_call(
        bn_relu_kernel,
        grid=(N,),
        in_specs=[
            pl.BlockSpec((1, C, HW), lambda n: (n, 0, 0)),
            pl.BlockSpec((C, 1), lambda n: (0, 0)),
            pl.BlockSpec((C, 1), lambda n: (0, 0)),
        ],
        out_specs=pl.BlockSpec((1, C, HW), lambda n: (n, 0, 0)),
        out_shape=jax.ShapeDtypeStruct((N, C, HW), jnp.float32),
        compiler_params=pltpu.CompilerParams(
            dimension_semantics=("parallel",),
            vmem_limit_bytes=VMEM_LIMIT),
    )(y, sc, sh)


# ---------------------------------------------------------------------------
# Wrapper-side constants / glue (all tiny, computed once per jit)
# ---------------------------------------------------------------------------
def _tap_masks(H, W):
    """(9, H*W) 0/1 masks: mask[k, p] = 1 iff pixel p's (dy, dx) neighbour is in-bounds."""
    h = jnp.arange(H, dtype=jnp.int32)
    w = jnp.arange(W, dtype=jnp.int32)
    rows = []
    for k in range(9):
        dy = k // 3 - 1
        dx = k % 3 - 1
        mh = (h + dy >= 0) & (h + dy < H)
        mw = (w + dx >= 0) & (w + dx < W)
        rows.append((mh[:, None] & mw[None, :]).reshape(H * W))
    return jnp.stack(rows).astype(jnp.float32)


def _conv_weight_taps(w_hwio):
    """(3, 3, Cin, Cout) HWIO -> (9, Cout, Cin), k = (dy+1)*3 + (dx+1)."""
    kh, kw, cin, cout = w_hwio.shape
    return jnp.transpose(w_hwio.reshape(kh * kw, cin, cout), (0, 2, 1))


def _bn_scale_shift(mom, gamma, beta, count):
    """Fold per-image partial moments (N, 2C, 1) into BN scale/shift of shape (C, 1).

    var = E[x^2] - mean^2 (biased, matching nn.BatchNorm2d training-mode forward).
    The subtraction can cancel for channels with |mean| >> std; the clamp keeps it
    non-negative.  A Welford-style combine of the per-image partials is the robust
    upgrade if that regime matters.
    """
    C = gamma.shape[0]
    tot = jnp.sum(mom, axis=0)[:, 0]                       # (2C,)
    mean = tot[:C] / count
    var = jnp.maximum(tot[C:] / count - mean * mean, 0.0)
    scale = gamma * jax.lax.rsqrt(var + EPS)
    shift = beta - mean * scale
    return scale.reshape(C, 1), shift.reshape(C, 1)


def double_conv(x_nchw, params):
    """Forward pass of DoubleConv. Input/output are NCHW like the PyTorch module.

    BatchNorm uses per-batch statistics (training-mode forward). The Conv2d biases
    are omitted because the following BatchNorm's mean subtraction cancels them.
    """
    N, Cin, H, W = x_nchw.shape
    Cout = params['w1'].shape[-1]
    HW = H * W
    count = N * HW

    x = x_nchw.reshape(N, Cin, HW)           # free metadata reshape, stays NCHW order
    masks = _tap_masks(H, W)                 # (9, HW)
    w1 = _conv_weight_taps(params['w1'])     # (9, Cout, Cin)
    w2 = _conv_weight_taps(params['w2'])     # (9, Cout, Cout)

    y1, mom1 = _conv_moments(x, w1, masks, W)
    sc1, sh1 = _bn_scale_shift(mom1, params['g1'], params['be1'], count)

    y2, mom2 = _bn_relu_conv_moments(y1, sc1, sh1, w2, masks, W)
    sc2, sh2 = _bn_scale_shift(mom2, params['g2'], params['be2'], count)

    out = _bn_relu_apply(y2, sc2, sh2)       # (N, Cout, HW)
    return out.reshape(N, Cout, H, W)


def init_double_conv_params(key, in_channels, out_channels):
    """Deterministic synthetic params matching the PyTorch module's shapes.

    Conv weights stored as (KH, KW, Cin, Cout). Conv biases are not created: a
    per-channel bias is mathematically cancelled by the BatchNorm that follows.
    BatchNorm affine params use the PyTorch default init (weight=1, bias=0).
    """
    k1, k2 = jax.random.split(key, 2)
    fan1 = in_channels * 9
    fan2 = out_channels * 9
    w1 = jax.random.uniform(k1, (3, 3, in_channels, out_channels),
                            jnp.float32, -1.0, 1.0) / jnp.sqrt(fan1)
    w2 = jax.random.uniform(k2, (3, 3, out_channels, out_channels),
                            jnp.float32, -1.0, 1.0) / jnp.sqrt(fan2)
    g1 = jnp.ones((out_channels,), jnp.float32)
    be1 = jnp.zeros((out_channels,), jnp.float32)
    g2 = jnp.ones((out_channels,), jnp.float32)
    be2 = jnp.zeros((out_channels,), jnp.float32)
    return dict(w1=w1, g1=g1, be1=be1, w2=w2, g2=g2, be2=be2)


def reference(x_nchw, params):
    """Pure-XLA reference with the same forward semantics (for a numeric cross-check)."""
    def block(x, w, g, b):
        y = jax.lax.conv_general_dilated(
            x, w, window_strides=(1, 1), padding=((1, 1), (1, 1)),
            dimension_numbers=('NHWC', 'HWIO', 'NHWC'))
        mean = jnp.mean(y, axis=(0, 1, 2))
        var = jnp.mean((y - mean) ** 2, axis=(0, 1, 2))
        return jnp.maximum((y - mean) * jax.lax.rsqrt(var + EPS) * g + b, 0.0)

    x = jnp.transpose(x_nchw, (0, 2, 3, 1))
    y = block(x, params['w1'], params['g1'], params['be1'])
    y = block(y, params['w2'], params['g2'], params['be2'])
    return jnp.transpose(y, (0, 3, 1, 2))


if __name__ == "__main__":
    key = jax.random.PRNGKey(0)
    kx, kp = jax.random.split(key)

    N, Cin, H, W = 2, 4, 16, 16
    Cout = 8

    x = jax.random.normal(kx, (N, Cin, H, W), jnp.float32)
    params = init_double_conv_params(kp, Cin, Cout)

    out = jax.block_until_ready(jax.jit(double_conv)(x, params))

    assert out.shape == (N, Cout, H, W), out.shape
    assert bool(jnp.all(jnp.isfinite(out))), "non-finite output"

    ref = jax.block_until_ready(reference(x, params))
    err = float(jnp.max(jnp.abs(out - ref)))
    assert err < 1e-3, f"mismatch vs reference: {err}"

    print("KERNEL_OK")
</pallas_src>

<mosaic_0001>
module attributes {stable_mosaic.version = 11 : i64} {
  func.func @conv_moments_kernel(%arg0: i32, %arg1: memref<1x4x256xf32, #tpu.memory_space<vmem>>, %arg2: memref<9x8x4xf32, #tpu.memory_space<vmem>>, %arg3: memref<9x256xf32, #tpu.memory_space<vmem>>, %arg4: memref<1x8x256xf32, #tpu.memory_space<vmem>>, %arg5: memref<1x16x1xf32, #tpu.memory_space<vmem>>) attributes {dimension_semantics = [#tpu.dimension_semantics<parallel>], iteration_bounds = array<i64: 2>, scalar_prefetch = 0 : i64, scratch_operands = 0 : i64, tpu.core_type = #tpu.core_type<tc>, window_params = [{transform_indices = @transform_0, window_bounds = array<i64: 1, 4, 256>}, {pipeline_mode = #tpu.pipeline_mode<synchronous>, transform_indices = @transform_1, window_bounds = array<i64: 9, 8, 4>}, {pipeline_mode = #tpu.pipeline_mode<synchronous>, transform_indices = @transform_2, window_bounds = array<i64: 9, 256>}, {transform_indices = @transform_3, window_bounds = array<i64: 1, 8, 256>}, {transform_indices = @transform_4, window_bounds = array<i64: 1, 16, 1>}]} {
    %c0 = arith.constant 0 : index
    %c0_0 = arith.constant 0 : index
    %c0_1 = arith.constant 0 : index
    %0 = vector.load %arg1[%c0, %c0_0, %c0_1] : memref<1x4x256xf32, #tpu.memory_space<vmem>>, vector<1x4x256xf32>
    %1 = vector.shape_cast %0 : vector<1x4x256xf32> to vector<4x256xf32>
    %cst = arith.constant 0.000000e+00 : f32
    %2 = vector.broadcast %cst : f32 to vector<8x256xf32>
    %c17_i32 = arith.constant 17 : i32
    %3 = tpu.dynamic_rotate %1 by %c17_i32 dim 1 : vector<4x256xf32>, i32 -> vector<4x256xf32>
    %c0_2 = arith.constant 0 : index
    %c0_3 = arith.constant 0 : index
    %4 = vector.load %arg3[%c0_2, %c0_3] : memref<9x256xf32, #tpu.memory_space<vmem>>, vector<1x256xf32>
    %5 = vector.broadcast %4 : vector<1x256xf32> to vector<4x256xf32>
    %6 = arith.mulf %3, %5 : vector<4x256xf32>
    %c0_4 = arith.constant 0 : index
    %c0_5 = arith.constant 0 : index
    %c0_6 = arith.constant 0 : index
    %7 = vector.load %arg2[%c0_4, %c0_5, %c0_6] : memref<9x8x4xf32, #tpu.memory_space<vmem>>, vector<1x8x4xf32>
    %8 = vector.shape_cast %7 : vector<1x8x4xf32> to vector<8x4xf32>
    %cst_7 = arith.constant dense<0.000000e+00> : vector<8x256xf32>
    %9 = tpu.matmul %8, %6, %cst_7 {dimension_numbers = #tpu.dot_dimension_numbers<[1], [0], [0], [1], [0, 0, 1, 1], [], []>} : vector<8x4xf32>, vector<4x256xf32>, vector<8x256xf32> -> vector<8x256xf32>
    %10 = arith.addf %2, %9 : vector<8x256xf32>
    %c16_i32 = arith.constant 16 : i32
    %11 = tpu.dynamic_rotate %1 by %c16_i32 dim 1 : vector<4x256xf32>, i32 -> vector<4x256xf32>
    %c1 = arith.constant 1 : index
    %c0_8 = arith.constant 0 : index
    %12 = vector.load %arg3[%c1, %c0_8] : memref<9x256xf32, #tpu.memory_space<vmem>>, vector<1x256xf32>
    %13 = vector.broadcast %12 : vector<1x256xf32> to vector<4x256xf32>
    %14 = arith.mulf %11, %13 : vector<4x256xf32>
    %c1_9 = arith.constant 1 : index
    %c0_10 = arith.constant 0 : index
    %c0_11 = arith.constant 0 : index
    %15 = vector.load %arg2[%c1_9, %c0_10, %c0_11] : memref<9x8x4xf32, #tpu.memory_space<vmem>>, vector<1x8x4xf32>
    %16 = vector.shape_cast %15 : vector<1x8x4xf32> to vector<8x4xf32>
    %cst_12 = arith.constant dense<0.000000e+00> : vector<8x256xf32>
    %17 = tpu.matmul %16, %14, %cst_12 {dimension_numbers = #tpu.dot_dimension_numbers<[1], [0], [0], [1], [0, 0, 1, 1], [], []>} : vector<8x4xf32>, vector<4x256xf32>, vector<8x256xf32> -> vector<8x256xf32>
    %18 = arith.addf %10, %17 : vector<8x256xf32>
    %c15_i32 = arith.constant 15 : i32
    %19 = tpu.dynamic_rotate %1 by %c15_i32 dim 1 : vector<4x256xf32>, i32 -> vector<4x256xf32>
    %c2 = arith.constant 2 : index
    %c0_13 = arith.constant 0 : index
    %20 = vector.load %arg3[%c2, %c0_13] : memref<9x256xf32, #tpu.memory_space<vmem>>, vector<1x256xf32>
    %21 = vector.broadcast %20 : vector<1x256xf32> to vector<4x256xf32>
    %22 = arith.mulf %19, %21 : vector<4x256xf32>
    %c2_14 = arith.constant 2 : index
    %c0_15 = arith.constant 0 : index
    %c0_16 = arith.constant 0 : index
    %23 = vector.load %arg2[%c2_14, %c0_15, %c0_16] : memref<9x8x4xf32, #tpu.memory_space<vmem>>, vector<1x8x4xf32>
    %24 = vector.shape_cast %23 : vector<1x8x4xf32> to vector<8x4xf32>
    %cst_17 = arith.constant dense<0.000000e+00> : vector<8x256xf32>
    %25 = tpu.matmul %24, %22, %cst_17 {dimension_numbers = #tpu.dot_dimension_numbers<[1], [0], [0], [1], [0, 0, 1, 1], [], []>} : vector<8x4xf32>, vector<4x256xf32>, vector<8x256xf32> -> vector<8x256xf32>
    %26 = arith.addf %18, %25 : vector<8x256xf32>
    %c1_i32 = arith.constant 1 : i32
    %27 = tpu.dynamic_rotate %1 by %c1_i32 dim 1 : vector<4x256xf32>, i32 -> vector<4x256xf32>
    %c3 = arith.constant 3 : index
    %c0_18 = arith.constant 0 : index
    %28 = vector.load %arg3[%c3, %c0_18] : memref<9x256xf32, #tpu.memory_space<vmem>>, vector<1x256xf32>
    %29 = vector.broadcast %28 : vector<1x256xf32> to vector<4x256xf32>
    %30 = arith.mulf %27, %29 : vector<4x256xf32>
    %c3_19 = arith.constant 3 : index
    %c0_20 = arith.constant 0 : index
    %c0_21 = arith.constant 0 : index
    %31 = vector.load %arg2[%c3_19, %c0_20, %c0_21] : memref<9x8x4xf32, #tpu.memory_space<vmem>>, vector<1x8x4xf32>
    %32 = vector.shape_cast %31 : vector<1x8x4xf32> to vector<8x4xf32>
    %cst_22 = arith.constant dense<0.000000e+00> : vector<8x256xf32>
    %33 = tpu.matmul %32, %30, %cst_22 {dimension_numbers = #tpu.dot_dimension_numbers<[1], [0], [0], [1], [0, 0, 1, 1], [], []>} : vector<8x4xf32>, vector<4x256xf32>, vector<8x256xf32> -> vector<8x256xf32>
    %34 = arith.addf %26, %33 : vector<8x256xf32>
    %c4 = arith.constant 4 : index
    %c0_23 = arith.constant 0 : index
    %c0_24 = arith.constant 0 : index
    %35 = vector.load %arg2[%c4, %c0_23, %c0_24] : memref<9x8x4xf32, #tpu.memory_space<vmem>>, vector<1x8x4xf32>
    %36 = vector.shape_cast %35 : vector<1x8x4xf32> to vector<8x4xf32>
    %cst_25 = arith.constant dense<0.000000e+00> : vector<8x256xf32>
    %37 = tpu.matmul %36, %1, %cst_25 {dimension_numbers = #tpu.dot_dimension_numbers<[1], [0], [0], [1], [0, 0, 1, 1], [], []>} : vector<8x4xf32>, vector<4x256xf32>, vector<8x256xf32> -> vector<8x256xf32>
    %38 = arith.addf %34, %37 : vector<8x256xf32>
    %c255_i32 = arith.constant 255 : i32
    %39 = tpu.dynamic_rotate %1 by %c255_i32 dim 1 : vector<4x256xf32>, i32 -> vector<4x256xf32>
    %c5 = arith.constant 5 : index
    %c0_26 = arith.constant 0 : index
    %40 = vector.load %arg3[%c5, %c0_26] : memref<9x256xf32, #tpu.memory_space<vmem>>, vector<1x256xf32>
    %41 = vector.broadcast %40 : vector<1x256xf32> to vector<4x256xf32>
    %42 = arith.mulf %39, %41 : vector<4x256xf32>
    %c5_27 = arith.constant 5 : index
    %c0_28 = arith.constant 0 : index
    %c0_29 = arith.constant 0 : index
    %43 = vector.load %arg2[%c5_27, %c0_28, %c0_29] : memref<9x8x4xf32, #tpu.memory_space<vmem>>, vector<1x8x4xf32>
    %44 = vector.shape_cast %43 : vector<1x8x4xf32> to vector<8x4xf32>
    %cst_30 = arith.constant dense<0.000000e+00> : vector<8x256xf32>
    %45 = tpu.matmul %44, %42, %cst_30 {dimension_numbers = #tpu.dot_dimension_numbers<[1], [0], [0], [1], [0, 0, 1, 1], [], []>} : vector<8x4xf32>, vector<4x256xf32>, vector<8x256xf32> -> vector<8x256xf32>
    %46 = arith.addf %38, %45 : vector<8x256xf32>
    %c241_i32 = arith.constant 241 : i32
    %47 = tpu.dynamic_rotate %1 by %c241_i32 dim 1 : vector<4x256xf32>, i32 -> vector<4x256xf32>
    %c6 = arith.constant 6 : index
    %c0_31 = arith.constant 0 : index
    %48 = vector.load %arg3[%c6, %c0_31] : memref<9x256xf32, #tpu.memory_space<vmem>>, vector<1x256xf32>
    %49 = vector.broadcast %48 : vector<1x256xf32> to vector<4x256xf32>
    %50 = arith.mulf %47, %49 : vector<4x256xf32>
    %c6_32 = arith.constant 6 : index
    %c0_33 = arith.constant 0 : index
    %c0_34 = arith.constant 0 : index
    %51 = vector.load %arg2[%c6_32, %c0_33, %c0_34] : memref<9x8x4xf32, #tpu.memory_space<vmem>>, vector<1x8x4xf32>
    %52 = vector.shape_cast %51 : vector<1x8x4xf32> to vector<8x4xf32>
    %cst_35 = arith.constant dense<0.000000e+00> : vector<8x256xf32>
    %53 = tpu.matmul %52, %50, %cst_35 {dimension_numbers = #tpu.dot_dimension_numbers<[1], [0], [0], [1], [0, 0, 1, 1], [], []>} : vector<8x4xf32>, vector<4x256xf32>, vector<8x256xf32> -> vector<8x256xf32>
    %54 = arith.addf %46, %53 : vector<8x256xf32>
    %c240_i32 = arith.constant 240 : i32
    %55 = tpu.dynamic_rotate %1 by %c240_i32 dim 1 : vector<4x256xf32>, i32 -> vector<4x256xf32>
    %c7 = arith.constant 7 : index
    %c0_36 = arith.constant 0 : index
    %56 = vector.load %arg3[%c7, %c0_36] : memref<9x256xf32, #tpu.memory_space<vmem>>, vector<1x256xf32>
    %57 = vector.broadcast %56 : vector<1x256xf32> to vector<4x256xf32>
    %58 = arith.mulf %55, %57 : vector<4x256xf32>
    %c7_37 = arith.constant 7 : index
    %c0_38 = arith.constant 0 : index
    %c0_39 = arith.constant 0 : index
    %59 = vector.load %arg2[%c7_37, %c0_38, %c0_39] : memref<9x8x4xf32, #tpu.memory_space<vmem>>, vector<1x8x4xf32>
    %60 = vector.shape_cast %59 : vector<1x8x4xf32> to vector<8x4xf32>
    %cst_40 = arith.constant dense<0.000000e+00> : vector<8x256xf32>
    %61 = tpu.matmul %60, %58, %cst_40 {dimension_numbers = #tpu.dot_dimension_numbers<[1], [0], [0], [1], [0, 0, 1, 1], [], []>} : vector<8x4xf32>, vector<4x256xf32>, vector<8x256xf32> -> vector<8x256xf32>
    %62 = arith.addf %54, %61 : vector<8x256xf32>
    %c239_i32 = arith.constant 239 : i32
    %63 = tpu.dynamic_rotate %1 by %c239_i32 dim 1 : vector<4x256xf32>, i32 -> vector<4x256xf32>
    %c8 = arith.constant 8 : index
    %c0_41 = arith.constant 0 : index
    %64 = vector.load %arg3[%c8, %c0_41] : memref<9x256xf32, #tpu.memory_space<vmem>>, vector<1x256xf32>
    %65 = vector.broadcast %64 : vector<1x256xf32> to vector<4x256xf32>
    %66 = arith.mulf %63, %65 : vector<4x256xf32>
    %c8_42 = arith.constant 8 : index
    %c0_43 = arith.constant 0 : index
    %c0_44 = arith.constant 0 : index
    %67 = vector.load %arg2[%c8_42, %c0_43, %c0_44] : memref<9x8x4xf32, #tpu.memory_space<vmem>>, vector<1x8x4xf32>
    %68 = vector.shape_cast %67 : vector<1x8x4xf32> to vector<8x4xf32>
    %cst_45 = arith.constant dense<0.000000e+00> : vector<8x256xf32>
    %69 = tpu.matmul %68, %66, %cst_45 {dimension_numbers = #tpu.dot_dimension_numbers<[1], [0], [0], [1], [0, 0, 1, 1], [], []>} : vector<8x4xf32>, vector<4x256xf32>, vector<8x256xf32> -> vector<8x256xf32>
    %70 = arith.addf %62, %69 : vector<8x256xf32>
    %c0_46 = arith.constant 0 : index
    %c0_47 = arith.constant 0 : index
    %c0_48 = arith.constant 0 : index
    %71 = vector.load %arg4[%c0_46, %c0_47, %c0_48] : memref<1x8x256xf32, #tpu.memory_space<vmem>>, vector<1x8x256xf32>
    %72 = vector.shape_cast %71 : vector<1x8x256xf32> to vector<8x256xf32>
    %73 = vector.shape_cast %70 : vector<8x256xf32> to vector<1x8x256xf32>
    tpu.vector_store %arg4[%c0_46, %c0_47, %c0_48], %73 {strides = array<i32>} : memref<1x8x256xf32, #tpu.memory_space<vmem>>, vector<1x8x256xf32>,
    %cst_49 = arith.constant dense<0.000000e+00> : vector<8xf32>
    %74 = vector.multi_reduction <add>, %70, %cst_49 [1] : vector<8x256xf32> to vector<8xf32>
    %75 = vector.shape_cast %74 : vector<8xf32> to vector<8x1xf32>
    %c0_50 = arith.constant 0 : index
    %c0_51 = arith.constant 0 : index
    %c0_52 = arith.constant 0 : index
    %76 = vector.load %arg5[%c0_50, %c0_51, %c0_52] : memref<1x16x1xf32, #tpu.memory_space<vmem>>, vector<1x8x1xf32>
    %77 = vector.shape_cast %76 : vector<1x8x1xf32> to vector<8x1xf32>
    %78 = vector.shape_cast %75 : vector<8x1xf32> to vector<1x8x1xf32>
    tpu.vector_store %arg5[%c0_50, %c0_51, %c0_52], %78 {strides = array<i32>} : memref<1x16x1xf32, #tpu.memory_space<vmem>>, vector<1x8x1xf32>,
    %79 = arith.mulf %70, %70 : vector<8x256xf32>
    %cst_53 = arith.constant dense<0.000000e+00> : vector<8xf32>
    %80 = vector.multi_reduction <add>, %79, %cst_53 [1] : vector<8x256xf32> to vector<8xf32>
    %81 = vector.shape_cast %80 : vector<8xf32> to vector<8x1xf32>
    %c0_54 = arith.constant 0 : index
    %c8_55 = arith.constant 8 : index
    %c0_56 = arith.constant 0 : index
    %82 = vector.load %arg5[%c0_54, %c8_55, %c0_56] : memref<1x16x1xf32, #tpu.memory_space<vmem>>, vector<1x8x1xf32>
    %83 = vector.shape_cast %82 : vector<1x8x1xf32> to vector<8x1xf32>
    %84 = vector.shape_cast %81 : vector<8x1xf32> to vector<1x8x1xf32>
    tpu.vector_store %arg5[%c0_54, %c8_55, %c0_56], %84 {strides = array<i32>} : memref<1x16x1xf32, #tpu.memory_space<vmem>>, vector<1x8x1xf32>,
    return
  }
  func.func @transform_0(%arg0: i32) -> (i32, i32, i32) {
    %c0_i32 = arith.constant 0 : i32
    %c0_i32_0 = arith.constant 0 : i32
    %c0_i32_1 = arith.constant 0 : i32
    return %arg0, %c0_i32, %c0_i32_0 : i32, i32, i32
  }
  func.func @transform_1(%arg0: i32) -> (i32, i32, i32) {
    %c0_i32 = arith.constant 0 : i32
    %c0_i32_0 = arith.constant 0 : i32
    %c0_i32_1 = arith.constant 0 : i32
    %c0_i32_2 = arith.constant 0 : i32
    return %c0_i32, %c0_i32_0, %c0_i32_1 : i32, i32, i32
  }
  func.func @transform_2(%arg0: i32) -> (i32, i32) {
    %c0_i32 = arith.constant 0 : i32
    %c0_i32_0 = arith.constant 0 : i32
    %c0_i32_1 = arith.constant 0 : i32
    return %c0_i32, %c0_i32_0 : i32, i32
  }
  func.func @transform_3(%arg0: i32) -> (i32, i32, i32) {
    %c0_i32 = arith.constant 0 : i32
    %c0_i32_0 = arith.constant 0 : i32
    %c0_i32_1 = arith.constant 0 : i32
    return %arg0, %c0_i32, %c0_i32_0 : i32, i32, i32
  }
  func.func @transform_4(%arg0: i32) -> (i32, i32, i32) {
    %c0_i32 = arith.constant 0 : i32
    %c0_i32_0 = arith.constant 0 : i32
    %c0_i32_1 = arith.constant 0 : i32
    return %arg0, %c0_i32, %c0_i32_0 : i32, i32, i32
  }
}

module attributes {stable_mosaic.version = 11 : i64} {
  func.func @bn_relu_kernel(%arg0: i32, %arg1: memref<1x8x256xf32, #tpu.memory_space<vmem>>, %arg2: memref<8x1xf32, #tpu.memory_space<vmem>>, %arg3: memref<8x1xf32, #tpu.memory_space<vmem>>, %arg4: memref<1x8x256xf32, #tpu.memory_space<vmem>>) attributes {dimension_semantics = [#tpu.dimension_semantics<parallel>], iteration_bounds = array<i64: 2>, scalar_prefetch = 0 : i64, scratch_operands = 0 : i64, tpu.core_type = #tpu.core_type<tc>, window_params = [{transform_indices = @transform_0, window_bounds = array<i64: 1, 8, 256>}, {pipeline_mode = #tpu.pipeline_mode<synchronous>, transform_indices = @transform_1, window_bounds = array<i64: 8, 1>}, {pipeline_mode = #tpu.pipeline_mode<synchronous>, transform_indices = @transform_2, window_bounds = array<i64: 8, 1>}, {transform_indices = @transform_3, window_bounds = array<i64: 1, 8, 256>}]} {
    %c0 = arith.constant 0 : index
    %c0_0 = arith.constant 0 : index
    %c0_1 = arith.constant 0 : index
    %0 = vector.load %arg1[%c0, %c0_0, %c0_1] : memref<1x8x256xf32, #tpu.memory_space<vmem>>, vector<1x8x256xf32>
    %1 = vector.shape_cast %0 : vector<1x8x256xf32> to vector<8x256xf32>
    %c0_2 = arith.constant 0 : index
    %c0_3 = arith.constant 0 : index
    %2 = vector.load %arg2[%c0_2, %c0_3] : memref<8x1xf32, #tpu.memory_space<vmem>>, vector<8x1xf32>
    %3 = vector.broadcast %2 : vector<8x1xf32> to vector<8x256xf32>
    %4 = arith.mulf %1, %3 : vector<8x256xf32>
    %c0_4 = arith.constant 0 : index
    %c0_5 = arith.constant 0 : index
    %5 = vector.load %arg3[%c0_4, %c0_5] : memref<8x1xf32, #tpu.memory_space<vmem>>, vector<8x1xf32>
    %6 = vector.broadcast %5 : vector<8x1xf32> to vector<8x256xf32>
    %7 = arith.addf %4, %6 : vector<8x256xf32>
    %cst = arith.constant 0.000000e+00 : f32
    %8 = vector.broadcast %cst : f32 to vector<8x256xf32>
    %9 = arith.maximumf %7, %8 : vector<8x256xf32>
    %c0_6 = arith.constant 0 : index
    %c0_7 = arith.constant 0 : index
    %c0_8 = arith.constant 0 : index
    %10 = vector.load %arg4[%c0_6, %c0_7, %c0_8] : memref<1x8x256xf32, #tpu.memory_space<vmem>>, vector<1x8x256xf32>
    %11 = vector.shape_cast %10 : vector<1x8x256xf32> to vector<8x256xf32>
    %12 = vector.shape_cast %9 : vector<8x256xf32> to vector<1x8x256xf32>
    tpu.vector_store %arg4[%c0_6, %c0_7, %c0_8], %12 {strides = array<i32>} : memref<1x8x256xf32, #tpu.memory_space<vmem>>, vector<1x8x256xf32>,
    return
  }
  func.func @transform_0(%arg0: i32) -> (i32, i32, i32) {
    %c0_i32 = arith.constant 0 : i32
    %c0_i32_0 = arith.constant 0 : i32
    %c0_i32_1 = arith.constant 0 : i32
    return %arg0, %c0_i32, %c0_i32_0 : i32, i32, i32
  }
  func.func @transform_1(%arg0: i32) -> (i32, i32) {
    %c0_i32 = arith.constant 0 : i32
    %c0_i32_0 = arith.constant 0 : i32
    %c0_i32_1 = arith.constant 0 : i32
    return %c0_i32, %c0_i32_0 : i32, i32
  }
  func.func @transform_2(%arg0: i32) -> (i32, i32) {
    %c0_i32 = arith.constant 0 : i32
    %c0_i32_0 = arith.constant 0 : i32
    %c0_i32_1 = arith.constant 0 : i32
    return %c0_i32, %c0_i32_0 : i32, i32
  }
  func.func @transform_3(%arg0: i32) -> (i32, i32, i32) {
    %c0_i32 = arith.constant 0 : i32
    %c0_i32_0 = arith.constant 0 : i32
    %c0_i32_1 = arith.constant 0 : i32
    return %arg0, %c0_i32, %c0_i32_0 : i32, i32, i32
  }
}

module attributes {stable_mosaic.version = 11 : i64} {
  func.func @bn_relu_conv_moments_kernel(%arg0: i32, %arg1: memref<1x8x256xf32, #tpu.memory_space<vmem>>, %arg2: memref<8x1xf32, #tpu.memory_space<vmem>>, %arg3: memref<8x1xf32, #tpu.memory_space<vmem>>, %arg4: memref<9x8x8xf32, #tpu.memory_space<vmem>>, %arg5: memref<9x256xf32, #tpu.memory_space<vmem>>, %arg6: memref<1x8x256xf32, #tpu.memory_space<vmem>>, %arg7: memref<1x16x1xf32, #tpu.memory_space<vmem>>) attributes {dimension_semantics = [#tpu.dimension_semantics<parallel>], iteration_bounds = array<i64: 2>, scalar_prefetch = 0 : i64, scratch_operands = 0 : i64, tpu.core_type = #tpu.core_type<tc>, window_params = [{transform_indices = @transform_0, window_bounds = array<i64: 1, 8, 256>}, {pipeline_mode = #tpu.pipeline_mode<synchronous>, transform_indices = @transform_1, window_bounds = array<i64: 8, 1>}, {pipeline_mode = #tpu.pipeline_mode<synchronous>, transform_indices = @transform_2, window_bounds = array<i64: 8, 1>}, {pipeline_mode = #tpu.pipeline_mode<synchronous>, transform_indices = @transform_3, window_bounds = array<i64: 9, 8, 8>}, {pipeline_mode = #tpu.pipeline_mode<synchronous>, transform_indices = @transform_4, window_bounds = array<i64: 9, 256>}, {transform_indices = @transform_5, window_bounds = array<i64: 1, 8, 256>}, {transform_indices = @transform_6, window_bounds = array<i64: 1, 16, 1>}]} {
    %c0 = arith.constant 0 : index
    %c0_0 = arith.constant 0 : index
    %c0_1 = arith.constant 0 : index
    %0 = vector.load %arg1[%c0, %c0_0, %c0_1] : memref<1x8x256xf32, #tpu.memory_space<vmem>>, vector<1x8x256xf32>
    %1 = vector.shape_cast %0 : vector<1x8x256xf32> to vector<8x256xf32>
    %c0_2 = arith.constant 0 : index
    %c0_3 = arith.constant 0 : index
    %2 = vector.load %arg2[%c0_2, %c0_3] : memref<8x1xf32, #tpu.memory_space<vmem>>, vector<8x1xf32>
    %3 = vector.broadcast %2 : vector<8x1xf32> to vector<8x256xf32>
    %4 = arith.mulf %1, %3 : vector<8x256xf32>
    %c0_4 = arith.constant 0 : index
    %c0_5 = arith.constant 0 : index
    %5 = vector.load %arg3[%c0_4, %c0_5] : memref<8x1xf32, #tpu.memory_space<vmem>>, vector<8x1xf32>
    %6 = vector.broadcast %5 : vector<8x1xf32> to vector<8x256xf32>
    %7 = arith.addf %4, %6 : vector<8x256xf32>
    %cst = arith.constant 0.000000e+00 : f32
    %8 = vector.broadcast %cst : f32 to vector<8x256xf32>
    %9 = arith.maximumf %7, %8 : vector<8x256xf32>
    %cst_6 = arith.constant 0.000000e+00 : f32
    %10 = vector.broadcast %cst_6 : f32 to vector<8x256xf32>
    %c17_i32 = arith.constant 17 : i32
    %11 = tpu.dynamic_rotate %9 by %c17_i32 dim 1 : vector<8x256xf32>, i32 -> vector<8x256xf32>
    %c0_7 = arith.constant 0 : index
    %c0_8 = arith.constant 0 : index
    %12 = vector.load %arg5[%c0_7, %c0_8] : memref<9x256xf32, #tpu.memory_space<vmem>>, vector<1x256xf32>
    %13 = vector.broadcast %12 : vector<1x256xf32> to vector<8x256xf32>
    %14 = arith.mulf %11, %13 : vector<8x256xf32>
    %c0_9 = arith.constant 0 : index
    %c0_10 = arith.constant 0 : index
    %c0_11 = arith.constant 0 : index
    %15 = vector.load %arg4[%c0_9, %c0_10, %c0_11] : memref<9x8x8xf32, #tpu.memory_space<vmem>>, vector<1x8x8xf32>
    %16 = vector.shape_cast %15 : vector<1x8x8xf32> to vector<8x8xf32>
    %cst_12 = arith.constant dense<0.000000e+00> : vector<8x256xf32>
    %17 = tpu.matmul %16, %14, %cst_12 {dimension_numbers = #tpu.dot_dimension_numbers<[1], [0], [0], [1], [0, 0, 1, 1], [], []>} : vector<8x8xf32>, vector<8x256xf32>, vector<8x256xf32> -> vector<8x256xf32>
    %18 = arith.addf %10, %17 : vector<8x256xf32>
    %c16_i32 = arith.constant 16 : i32
    %19 = tpu.dynamic_rotate %9 by %c16_i32 dim 1 : vector<8x256xf32>, i32 -> vector<8x256xf32>
    %c1 = arith.constant 1 : index
    %c0_13 = arith.constant 0 : index
    %20 = vector.load %arg5[%c1, %c0_13] : memref<9x256xf32, #tpu.memory_space<vmem>>, vector<1x256xf32>
    %21 = vector.broadcast %20 : vector<1x256xf32> to vector<8x256xf32>
    %22 = arith.mulf %19, %21 : vector<8x256xf32>
    %c1_14 = arith.constant 1 : index
    %c0_15 = arith.constant 0 : index
    %c0_16 = arith.constant 0 : index
    %23 = vector.load %arg4[%c1_14, %c0_15, %c0_16] : memref<9x8x8xf32, #tpu.memory_space<vmem>>, vector<1x8x8xf32>
    %24 = vector.shape_cast %23 : vector<1x8x8xf32> to vector<8x8xf32>
    %cst_17 = arith.constant dense<0.000000e+00> : vector<8x256xf32>
    %25 = tpu.matmul %24, %22, %cst_17 {dimension_numbers = #tpu.dot_dimension_numbers<[1], [0], [0], [1], [0, 0, 1, 1], [], []>} : vector<8x8xf32>, vector<8x256xf32>, vector<8x256xf32> -> vector<8x256xf32>
    %26 = arith.addf %18, %25 : vector<8x256xf32>
    %c15_i32 = arith.constant 15 : i32
    %27 = tpu.dynamic_rotate %9 by %c15_i32 dim 1 : vector<8x256xf32>, i32 -> vector<8x256xf32>
    %c2 = arith.constant 2 : index
    %c0_18 = arith.constant 0 : index
    %28 = vector.load %arg5[%c2, %c0_18] : memref<9x256xf32, #tpu.memory_space<vmem>>, vector<1x256xf32>
    %29 = vector.broadcast %28 : vector<1x256xf32> to vector<8x256xf32>
    %30 = arith.mulf %27, %29 : vector<8x256xf32>
    %c2_19 = arith.constant 2 : index
    %c0_20 = arith.constant 0 : index
    %c0_21 = arith.constant 0 : index
    %31 = vector.load %arg4[%c2_19, %c0_20, %c0_21] : memref<9x8x8xf32, #tpu.memory_space<vmem>>, vector<1x8x8xf32>
    %32 = vector.shape_cast %31 : vector<1x8x8xf32> to vector<8x8xf32>
    %cst_22 = arith.constant dense<0.000000e+00> : vector<8x256xf32>
    %33 = tpu.matmul %32, %30, %cst_22 {dimension_numbers = #tpu.dot_dimension_numbers<[1], [0], [0], [1], [0, 0, 1, 1], [], []>} : vector<8x8xf32>, vector<8x256xf32>, vector<8x256xf32> -> vector<8x256xf32>
    %34 = arith.addf %26, %33 : vector<8x256xf32>
    %c1_i32 = arith.constant 1 : i32
    %35 = tpu.dynamic_rotate %9 by %c1_i32 dim 1 : vector<8x256xf32>, i32 -> vector<8x256xf32>
    %c3 = arith.constant 3 : index
    %c0_23 = arith.constant 0 : index
    %36 = vector.load %arg5[%c3, %c0_23] : memref<9x256xf32, #tpu.memory_space<vmem>>, vector<1x256xf32>
    %37 = vector.broadcast %36 : vector<1x256xf32> to vector<8x256xf32>
    %38 = arith.mulf %35, %37 : vector<8x256xf32>
    %c3_24 = arith.constant 3 : index
    %c0_25 = arith.constant 0 : index
    %c0_26 = arith.constant 0 : index
    %39 = vector.load %arg4[%c3_24, %c0_25, %c0_26] : memref<9x8x8xf32, #tpu.memory_space<vmem>>, vector<1x8x8xf32>
    %40 = vector.shape_cast %39 : vector<1x8x8xf32> to vector<8x8xf32>
    %cst_27 = arith.constant dense<0.000000e+00> : vector<8x256xf32>
    %41 = tpu.matmul %40, %38, %cst_27 {dimension_numbers = #tpu.dot_dimension_numbers<[1], [0], [0], [1], [0, 0, 1, 1], [], []>} : vector<8x8xf32>, vector<8x256xf32>, vector<8x256xf32> -> vector<8x256xf32>
    %42 = arith.addf %34, %41 : vector<8x256xf32>
    %c4 = arith.constant 4 : index
    %c0_28 = arith.constant 0 : index
    %c0_29 = arith.constant 0 : index
    %43 = vector.load %arg4[%c4, %c0_28, %c0_29] : memref<9x8x8xf32, #tpu.memory_space<vmem>>, vector<1x8x8xf32>
    %44 = vector.shape_cast %43 : vector<1x8x8xf32> to vector<8x8xf32>
    %cst_30 = arith.constant dense<0.000000e+00> : vector<8x256xf32>
    %45 = tpu.matmul %44, %9, %cst_30 {dimension_numbers = #tpu.dot_dimension_numbers<[1], [0], [0], [1], [0, 0, 1, 1], [], []>} : vector<8x8xf32>, vector<8x256xf32>, vector<8x256xf32> -> vector<8x256xf32>
    %46 = arith.addf %42, %45 : vector<8x256xf32>
    %c255_i32 = arith.constant 255 : i32
    %47 = tpu.dynamic_rotate %9 by %c255_i32 dim 1 : vector<8x256xf32>, i32 -> vector<8x256xf32>
    %c5 = arith.constant 5 : index
    %c0_31 = arith.constant 0 : index
    %48 = vector.load %arg5[%c5, %c0_31] : memref<9x256xf32, #tpu.memory_space<vmem>>, vector<1x256xf32>
    %49 = vector.broadcast %48 : vector<1x256xf32> to vector<8x256xf32>
    %50 = arith.mulf %47, %49 : vector<8x256xf32>
    %c5_32 = arith.constant 5 : index
    %c0_33 = arith.constant 0 : index
    %c0_34 = arith.constant 0 : index
    %51 = vector.load %arg4[%c5_32, %c0_33, %c0_34] : memref<9x8x8xf32, #tpu.memory_space<vmem>>, vector<1x8x8xf32>
    %52 = vector.shape_cast %51 : vector<1x8x8xf32> to vector<8x8xf32>
    %cst_35 = arith.constant dense<0.000000e+00> : vector<8x256xf32>
    %53 = tpu.matmul %52, %50, %cst_35 {dimension_numbers = #tpu.dot_dimension_numbers<[1], [0], [0], [1], [0, 0, 1, 1], [], []>} : vector<8x8xf32>, vector<8x256xf32>, vector<8x256xf32> -> vector<8x256xf32>
    %54 = arith.addf %46, %53 : vector<8x256xf32>
    %c241_i32 = arith.constant 241 : i32
    %55 = tpu.dynamic_rotate %9 by %c241_i32 dim 1 : vector<8x256xf32>, i32 -> vector<8x256xf32>
    %c6 = arith.constant 6 : index
    %c0_36 = arith.constant 0 : index
    %56 = vector.load %arg5[%c6, %c0_36] : memref<9x256xf32, #tpu.memory_space<vmem>>, vector<1x256xf32>
    %57 = vector.broadcast %56 : vector<1x256xf32> to vector<8x256xf32>
    %58 = arith.mulf %55, %57 : vector<8x256xf32>
    %c6_37 = arith.constant 6 : index
    %c0_38 = arith.constant 0 : index
    %c0_39 = arith.constant 0 : index
    %59 = vector.load %arg4[%c6_37, %c0_38, %c0_39] : memref<9x8x8xf32, #tpu.memory_space<vmem>>, vector<1x8x8xf32>
    %60 = vector.shape_cast %59 : vector<1x8x8xf32> to vector<8x8xf32>
    %cst_40 = arith.constant dense<0.000000e+00> : vector<8x256xf32>
    %61 = tpu.matmul %60, %58, %cst_40 {dimension_numbers = #tpu.dot_dimension_numbers<[1], [0], [0], [1], [0, 0, 1, 1], [], []>} : vector<8x8xf32>, vector<8x256xf32>, vector<8x256xf32> -> vector<8x256xf32>
    %62 = arith.addf %54, %61 : vector<8x256xf32>
    %c240_i32 = arith.constant 240 : i32
    %63 = tpu.dynamic_rotate %9 by %c240_i32 dim 1 : vector<8x256xf32>, i32 -> vector<8x256xf32>
    %c7 = arith.constant 7 : index
    %c0_41 = arith.constant 0 : index
    %64 = vector.load %arg5[%c7, %c0_41] : memref<9x256xf32, #tpu.memory_space<vmem>>, vector<1x256xf32>
    %65 = vector.broadcast %64 : vector<1x256xf32> to vector<8x256xf32>
    %66 = arith.mulf %63, %65 : vector<8x256xf32>
    %c7_42 = arith.constant 7 : index
    %c0_43 = arith.constant 0 : index
    %c0_44 = arith.constant 0 : index
    %67 = vector.load %arg4[%c7_42, %c0_43, %c0_44] : memref<9x8x8xf32, #tpu.memory_space<vmem>>, vector<1x8x8xf32>
    %68 = vector.shape_cast %67 : vector<1x8x8xf32> to vector<8x8xf32>
    %cst_45 = arith.constant dense<0.000000e+00> : vector<8x256xf32>
    %69 = tpu.matmul %68, %66, %cst_45 {dimension_numbers = #tpu.dot_dimension_numbers<[1], [0], [0], [1], [0, 0, 1, 1], [], []>} : vector<8x8xf32>, vector<8x256xf32>, vector<8x256xf32> -> vector<8x256xf32>
    %70 = arith.addf %62, %69 : vector<8x256xf32>
    %c239_i32 = arith.constant 239 : i32
    %71 = tpu.dynamic_rotate %9 by %c239_i32 dim 1 : vector<8x256xf32>, i32 -> vector<8x256xf32>
    %c8 = arith.constant 8 : index
    %c0_46 = arith.constant 0 : index
    %72 = vector.load %arg5[%c8, %c0_46] : memref<9x256xf32, #tpu.memory_space<vmem>>, vector<1x256xf32>
    %73 = vector.broadcast %72 : vector<1x256xf32> to vector<8x256xf32>
    %74 = arith.mulf %71, %73 : vector<8x256xf32>
    %c8_47 = arith.constant 8 : index
    %c0_48 = arith.constant 0 : index
    %c0_49 = arith.constant 0 : index
    %75 = vector.load %arg4[%c8_47, %c0_48, %c0_49] : memref<9x8x8xf32, #tpu.memory_space<vmem>>, vector<1x8x8xf32>
    %76 = vector.shape_cast %75 : vector<1x8x8xf32> to vector<8x8xf32>
    %cst_50 = arith.constant dense<0.000000e+00> : vector<8x256xf32>
    %77 = tpu.matmul %76, %74, %cst_50 {dimension_numbers = #tpu.dot_dimension_numbers<[1], [0], [0], [1], [0, 0, 1, 1], [], []>} : vector<8x8xf32>, vector<8x256xf32>, vector<8x256xf32> -> vector<8x256xf32>
    %78 = arith.addf %70, %77 : vector<8x256xf32>
    %c0_51 = arith.constant 0 : index
    %c0_52 = arith.constant 0 : index
    %c0_53 = arith.constant 0 : index
    %79 = vector.load %arg6[%c0_51, %c0_52, %c0_53] : memref<1x8x256xf32, #tpu.memory_space<vmem>>, vector<1x8x256xf32>
    %80 = vector.shape_cast %79 : vector<1x8x256xf32> to vector<8x256xf32>
    %81 = vector.shape_cast %78 : vector<8x256xf32> to vector<1x8x256xf32>
    tpu.vector_store %arg6[%c0_51, %c0_52, %c0_53], %81 {strides = array<i32>} : memref<1x8x256xf32, #tpu.memory_space<vmem>>, vector<1x8x256xf32>,
    %cst_54 = arith.constant dense<0.000000e+00> : vector<8xf32>
    %82 = vector.multi_reduction <add>, %78, %cst_54 [1] : vector<8x256xf32> to vector<8xf32>
    %83 = vector.shape_cast %82 : vector<8xf32> to vector<8x1xf32>
    %c0_55 = arith.constant 0 : index
    %c0_56 = arith.constant 0 : index
    %c0_57 = arith.constant 0 : index
    %84 = vector.load %arg7[%c0_55, %c0_56, %c0_57] : memref<1x16x1xf32, #tpu.memory_space<vmem>>, vector<1x8x1xf32>
    %85 = vector.shape_cast %84 : vector<1x8x1xf32> to vector<8x1xf32>
    %86 = vector.shape_cast %83 : vector<8x1xf32> to vector<1x8x1xf32>
    tpu.vector_store %arg7[%c0_55, %c0_56, %c0_57], %86 {strides = array<i32>} : memref<1x16x1xf32, #tpu.memory_space<vmem>>, vector<1x8x1xf32>,
    %87 = arith.mulf %78, %78 : vector<8x256xf32>
    %cst_58 = arith.constant dense<0.000000e+00> : vector<8xf32>
    %88 = vector.multi_reduction <add>, %87, %cst_58 [1] : vector<8x256xf32> to vector<8xf32>
    %89 = vector.shape_cast %88 : vector<8xf32> to vector<8x1xf32>
    %c0_59 = arith.constant 0 : index
    %c8_60 = arith.constant 8 : index
    %c0_61 = arith.constant 0 : index
    %90 = vector.load %arg7[%c0_59, %c8_60, %c0_61] : memref<1x16x1xf32, #tpu.memory_space<vmem>>, vector<1x8x1xf32>
    %91 = vector.shape_cast %90 : vector<1x8x1xf32> to vector<8x1xf32>
    %92 = vector.shape_cast %89 : vector<8x1xf32> to vector<1x8x1xf32>
    tpu.vector_store %arg7[%c0_59, %c8_60, %c0_61], %92 {strides = array<i32>} : memref<1x16x1xf32, #tpu.memory_space<vmem>>, vector<1x8x1xf32>,
    return
  }
  func.func @transform_0(%arg0: i32) -> (i32, i32, i32) {
    %c0_i32 = arith.constant 0 : i32
    %c0_i32_0 = arith.constant 0 : i32
    %c0_i32_1 = arith.constant 0 : i32
    return %arg0, %c0_i32, %c0_i32_0 : i32, i32, i32
  }
  func.func @transform_1(%arg0: i32) -> (i32, i32) {
    %c0_i32 = arith.constant 0 : i32
    %c0_i32_0 = arith.constant 0 : i32
    %c0_i32_1 = arith.constant 0 : i32
    return %c0_i32, %c0_i32_0 : i32, i32
  }
  func.func @transform_2(%arg0: i32) -> (i32, i32) {
    %c0_i32 = arith.constant 0 : i32
    %c0_i32_0 = arith.constant 0 : i32
    %c0_i32_1 = arith.constant 0 : i32
    return %c0_i32, %c0_i32_0 : i32, i32
  }
  func.func @transform_3(%arg0: i32) -> (i32, i32, i32) {
    %c0_i32 = arith.constant 0 : i32
    %c0_i32_0 = arith.constant 0 : i32
    %c0_i32_1 = arith.constant 0 : i32
    %c0_i32_2 = arith.constant 0 : i32
    return %c0_i32, %c0_i32_0, %c0_i32_1 : i32, i32, i32
  }
  func.func @transform_4(%arg0: i32) -> (i32, i32) {
    %c0_i32 = arith.constant 0 : i32
    %c0_i32_0 = arith.constant 0 : i32
    %c0_i32_1 = arith.constant 0 : i32
    return %c0_i32, %c0_i32_0 : i32, i32
  }
  func.func @transform_5(%arg0: i32) -> (i32, i32, i32) {
    %c0_i32 = arith.constant 0 : i32
    %c0_i32_0 = arith.constant 0 : i32
    %c0_i32_1 = arith.constant 0 : i32
    return %arg0, %c0_i32, %c0_i32_0 : i32, i32, i32
  }
  func.func @transform_6(%arg0: i32) -> (i32, i32, i32) {
    %c0_i32 = arith.constant 0 : i32
    %c0_i32_0 = arith.constant 0 : i32
    %c0_i32_1 = arith.constant 0 : i32
    return %arg0, %c0_i32, %c0_i32_0 : i32, i32, i32
  }
}

</mosaic_0001>

<llo_original>
// kernel: double_conv.5
$region0: #{double_conv.5}
  #allocation0 [shape = 'u32[]', space=smem, size = 0x4, offset = 0x4, fixed_abs, tag = 'smem constant byte address 0x4 - core index']
  #allocation1 [shape = 'u32[72,128]{1,0:T(1,128)}', space=vmem, size = 0x9000, scoped, tag = 'internal scratch']
  %s0 = inlined_call_operand.vmem [shape: f32[2,8,256], index: 0, kind: input, shape index: {}]
  %s1 = inlined_call_operand.vmem [shape: f32[8,1], index: 1, kind: input, shape index: {}]
  %s2 = inlined_call_operand.vmem [shape: f32[8,1], index: 2, kind: input, shape index: {}]
  %s3 = inlined_call_operand.vmem [shape: f32[2,8,256], index: 3, kind: output, shape index: {}]
  %s4 = sld [smem:[#allocation0]]
  $region45: #{double_conv.5} parent=0
    _
  %s6 = ssub.s32 1, %s4
  %s7 = scalar_select 0, %s6, %s4
  loop: start=0, step=1, limit=4
  $region2: #{double_conv.5} parent=0 // loop_pre_header
    _
  $region3: #{double_conv.5} parent=0 // loop_header
    %s9 = sphi 0, %s13
    %p10 = scmp.ge.s32.totalorder %s9, 4
    %s19 = sphi 0, %s21
    %s22 = sphi 0, %s19
    %s23 = sphi 0, %s22
    %s39 = sphi 0, %s23
    %s43 = sphi 0, %s43
    %s45 = sphi 0, %s43
    %s46 = sphi 0, %s45
    %s60 = sphi 0, %s46
    %s64 = sphi 0, %s64
    %s66 = sphi 0, %s64
    %s67 = sphi 0, %s66
    %s81 = sphi 0, %s67
    %s87 = sphi 0, %s89
    %s90 = sphi 0, %s87
    %s91 = sphi 0, %s90
    %s107 = sphi 0, %s91
  $region4: #{double_conv.5} parent=0 // loop_header_branch
    %12 = sbr.rel (%p10) target = $region8
  $region5: #{double_conv.5} parent=0 // loop_body
    %s14 = ssub.s32 %s9, 1
    %s15 = ssub.s32 %s9, 2
    %s16 = sadd.s32 %s9, 1
    %s17 = ssub.s32 %s9, %s16
    %p18 = scmp.eq.s32.totalorder %s17, 0
    %s20 = sadd.s32 %s19, 1
    %s21 = scalar_select %p18, %s19, %s20
    %p24 = pneg %p18
    %p25 = scmp.eq.s32.totalorder %s9, 1
    %p26 = por %p24, %p25
    %p27 = scmp.ne.s32.totalorder %s19, %s22
    %p28 = scmp.eq.s32.totalorder %s9, 0
    %p29 = por %p27, %p28
    %p30 = scmp.ne.s32.totalorder %s19, %s22
    %p31 = scmp.eq.s32.totalorder %s14, 1
    %p32 = por %p30, %p31
    %p33 = scmp.ne.s32.totalorder %s22, %s23
    %p34 = scmp.eq.s32.totalorder %s14, 0
    %p35 = por %p33, %p34
    %p36 = scmp.ne.s32.totalorder %s22, %s23
    %p37 = scmp.eq.s32.totalorder %s15, 1
    %p38 = por %p36, %p37
    %p40 = scmp.ne.s32.totalorder %s23, %s39
    %p41 = scmp.eq.s32.totalorder %s15, 0
    %p42 = por %p40, %p41
    %s44 = sadd.s32 %s43, 1
    %p47 = scmp.eq.s32.totalorder %s9, 1
    %p48 = scmp.ne.s32.totalorder %s43, %s45
    %p49 = scmp.eq.s32.totalorder %s9, 0
    %p50 = por %p48, %p49
    %p51 = scmp.ne.s32.totalorder %s43, %s45
    %p52 = scmp.eq.s32.totalorder %s14, 1
    %p53 = por %p51, %p52
    %p54 = scmp.ne.s32.totalorder %s45, %s46
    %p55 = scmp.eq.s32.totalorder %s14, 0
    %p56 = por %p54, %p55
    %p57 = scmp.ne.s32.totalorder %s45, %s46
    %p58 = scmp.eq.s32.totalorder %s15, 1
    %p59 = por %p57, %p58
    %p61 = scmp.ne.s32.totalorder %s46, %s60
    %p62 = scmp.eq.s32.totalorder %s15, 0
    %p63 = por %p61, %p62
    %s65 = sadd.s32 %s64, 1
    %p68 = scmp.eq.s32.totalorder %s9, 1
    %p69 = scmp.ne.s32.totalorder %s64, %s66
    %p70 = scmp.eq.s32.totalorder %s9, 0
    %p71 = por %p69, %p70
    %p72 = scmp.ne.s32.totalorder %s64, %s66
    %p73 = scmp.eq.s32.totalorder %s14, 1
    %p74 = por %p72, %p73
    %p75 = scmp.ne.s32.totalorder %s66, %s67
    %p76 = scmp.eq.s32.totalorder %s14, 0
    %p77 = por %p75, %p76
    %p78 = scmp.ne.s32.totalorder %s66, %s67
    %p79 = scmp.eq.s32.totalorder %s15, 1
    %p80 = por %p78, %p79
    %p82 = scmp.ne.s32.totalorder %s67, %s81
    %p83 = scmp.eq.s32.totalorder %s15, 0
    %p84 = por %p82, %p83
    %s85 = ssub.s32 %s9, %s16
    %p86 = scmp.eq.s32.totalorder %s85, 0
    %s88 = sadd.s32 %s87, 1
    %s89 = scalar_select %p86, %s87, %s88
    %p92 = pneg %p86
    %p93 = scmp.eq.s32.totalorder %s9, 1
    %p94 = por %p92, %p93
    %p95 = scmp.ne.s32.totalorder %s87, %s90
    %p96 = scmp.eq.s32.totalorder %s9, 0
    %p97 = por %p95, %p96
    %p98 = scmp.ne.s32.totalorder %s87, %s90
    %p99 = scmp.eq.s32.totalorder %s14, 1
    %p100 = por %p98, %p99
    %p101 = scmp.ne.s32.totalorder %s90, %s91
    %p102 = scmp.eq.s32.totalorder %s14, 0
    %p103 = por %p101, %p102
    %p104 = scmp.ne.s32.totalorder %s90, %s91
    %p105 = scmp.eq.s32.totalorder %s15, 1
    %p106 = por %p104, %p105
    %p108 = scmp.ne.s32.totalorder %s91, %s107
    %p109 = scmp.eq.s32.totalorder %s15, 0
    %p110 = por %p108, %p109
    %p111 = scmp.le.s32.totalorder 1, %s9
    %p112 = scmp.lt.s32.totalorder %s9, 3
    %p113 = pnand %p111, %p112
    %p114 = pneg %p113
    // Predicated region
    $region9: #{double_conv.5} parent=5 // pred_check
      _
    $region10: #{double_conv.5} parent=5 // pred_check_branch
      %116 = sbr.rel (%p113) target = $region12
    $region11: #{double_conv.5} parent=5 // pred_region
      %s117 = ssub.s32 %s9, 1
      // Predicated region
      $region13: #{double_conv.5} parent=11 // pred_check
        %p118 = pneg %p56
      $region14: #{double_conv.5} parent=11 // pred_check_branch
        %120 = sbr.rel (%p118) target = $region16
      $region15: #{double_conv.5} parent=11 // pred_region
        _
      $region16: #{double_conv.5} parent=11 // pred_fallthru
        _
      // Predicated region
      $region17: #{double_conv.5} parent=11 // pred_check
        %p121 = pneg %p77
      $region18: #{double_conv.5} parent=11 // pred_check_branch
        %123 = sbr.rel (%p121) target = $region20
      $region19: #{double_conv.5} parent=11 // pred_region
        _
      $region20: #{double_conv.5} parent=11 // pred_fallthru
        _
    $region12: #{double_conv.5} parent=5 // pred_fallthru
      _
    %p124 = scmp.lt.s32.totalorder %s9, 2
    // Predicated region
    $region21: #{double_conv.5} parent=5 // pred_check
      %p125 = pneg %p124
    $region22: #{double_conv.5} parent=5 // pred_check_branch
      %127 = sbr.rel (%p125) target = $region24
    $region23: #{double_conv.5} parent=5 // pred_region
      // Predicated region
      $region25: #{double_conv.5} parent=23 // pred_check
        %p128 = pneg %p29
      $region26: #{double_conv.5} parent=23 // pred_check_branch
        %130 = sbr.rel (%p128) target = $region28
      $region27: #{double_conv.5} parent=23 // pred_region
        %p131 = scmp.lt.s32.totalorder %s9, 1
        %s132 = scalar_select %p131, %s9, 1
        %s133 = smul.addr %s132, 2
        %s134 = smul.addr %s133, 8
        %s135 = scalar_lea.vmem %s0, %s134
      $region28: #{double_conv.5} parent=23 // pred_fallthru
        _
    $region24: #{double_conv.5} parent=5 // pred_fallthru
      _
    %p136 = scmp.le.s32.totalorder 1, %s9
    %p137 = scmp.lt.s32.totalorder %s9, 3
    %p138 = pnand %p136, %p137
    %p139 = pneg %p138
    // Predicated region
    $region29: #{double_conv.5} parent=5 // pred_check
      _
    $region30: #{double_conv.5} parent=5 // pred_check_branch
      %141 = sbr.rel (%p138) target = $region32
    $region31: #{double_conv.5} parent=5 // pred_region
      %s142 = ssub.s32 %s9, 1
      %p143 = scmp.lt.s32.totalorder %s14, 1
      %s144 = scalar_select %p143, %s14, 1
      %s145 = smul.addr %s144, 2
      %s146 = smul.addr %s145, 8
      %s147 = scalar_lea.vmem %s0, %s146
      %p148 = pneg %p35
      %p149 = pneg %p32
      %p150 = pneg %p56
      %p151 = pneg %p53
      %p152 = pneg %p77
      %p153 = pneg %p74
      %p154 = pneg %p103
      %p155 = pneg %p100
      %p156 = scmp.lt.s32.totalorder %s14, 1
      %s157 = scalar_select %p156, %s14, 1
      %s158 = smul.addr %s157, 2
      %s159 = smul.addr %s158, 8
      %s160 = scalar_lea.vmem %s3, %s159
      %p161 = scmp.lt.s32.totalorder %s14, 1
      %s162 = scalar_select %p161, %s14, 1
      %s163 = smul.addr %s162, 2
      %s164 = smul.addr %s163, 8
      %s165 = scalar_lea.vmem %s0, %s164
      %p166 = scmp.lt.s32.totalorder %s14, 1
      %s167 = scalar_select %p166, %s14, 1
      %s168 = smul.addr %s167, 2
      %s169 = smul.addr %s168, 8
      %s170 = scalar_lea.vmem %s3, %s169
      %v171 = vld [vmem:[%s165] sm:$0xff]
      %v172 = vld [vmem:[%s165 + $0x8] sm:$0xff]
      %v173 = vld [vmem:[%s1] sm:$0xff]
      %175 = vset.pattern.permute.xlu0 0
      %176 = vperm.xlu0 %175, %v173
      %v177 = vpop.permute.xlu0 %176
      %v179 = vmul.f32 %v171, %v177
      %v180 = vmul.f32 %v172, %v177
      %v181 = vld [vmem:[%s2] sm:$0xff]
      %183 = vset.pattern.permute.xlu0 0
      %184 = vperm.xlu0 %183, %v181
      %v185 = vpop.permute.xlu0 %184
      %v187 = vadd.f32 %v179, %v185
      %v188 = vadd.f32 %v180, %v185
      %v189 = vmax.f32 %v187, 0.0
      %v190 = vmax.f32 %v188, 0.0
      %191 = vst [vmem:[%s170] sm:$0xff] %v189
      %192 = vst [vmem:[%s170 + $0x8] sm:$0xff] %v190
      %p193 = scmp.lt.s32.totalorder %s14, 1
      %s194 = scalar_select %p193, %s14, 1
      %s195 = smul.addr %s194, 2
      %s196 = smul.addr %s195, 8
      %s197 = scalar_lea.vmem %s3, %s196
      // Predicated region
      $region33: #{double_conv.5} parent=31 // pred_check
        %p198 = pneg %p100
      $region34: #{double_conv.5} parent=31 // pred_check_branch
        %200 = sbr.rel (%p198) target = $region36
      $region35: #{double_conv.5} parent=31 // pred_region
        _
      $region36: #{double_conv.5} parent=31 // pred_fallthru
        _
    $region32: #{double_conv.5} parent=5 // pred_fallthru
      _
    %p201 = scmp.le.s32.totalorder 2, %s9
    // Predicated region
    $region37: #{double_conv.5} parent=5 // pred_check
      %p202 = pneg %p201
    $region38: #{double_conv.5} parent=5 // pred_check_branch
      %204 = sbr.rel (%p202) target = $region40
    $region39: #{double_conv.5} parent=5 // pred_region
      %s205 = ssub.s32 %s9, 2
      // Predicated region
      $region41: #{double_conv.5} parent=39 // pred_check
        %p206 = pneg %p106
      $region42: #{double_conv.5} parent=39 // pred_check_branch
        %208 = sbr.rel (%p206) target = $region44
      $region43: #{double_conv.5} parent=39 // pred_region
        %p209 = scmp.lt.s32.totalorder %s15, 1
        %s210 = scalar_select %p209, %s15, 1
        %s211 = smul.addr %s210, 2
        %s212 = smul.addr %s211, 8
        %s213 = scalar_lea.vmem %s3, %s212
      $region44: #{double_conv.5} parent=39 // pred_fallthru
        _
    $region40: #{double_conv.5} parent=5 // pred_fallthru
      _
  $region6: #{double_conv.5} parent=0 // loop_footer
    %s13 = sadd.s32 1, %s9
  $region7: #{double_conv.5} parent=0 // loop_footer_branch
    %8 = sbr.rel target = $region3
  $region8: #{double_conv.5} parent=0 // loop_exit
    _

// kernel: double_conv.3
$region0: #{double_conv.3}
  #allocation0 [shape = 'u32[]', space=smem, size = 0x4, offset = 0x4, fixed_abs, tag = 'smem constant byte address 0x4 - core index']
  #allocation1 [shape = 'u32[72,128]{1,0:T(1,128)}', space=vmem, size = 0x9000, scoped, tag = 'internal scratch']
  %s0 = inlined_call_operand.vmem [shape: f32[2,4,256], index: 0, kind: input, shape index: {}]
  %s1 = inlined_call_operand.vmem [shape: f32[9,8,4], index: 1, kind: input, shape index: {}]
  %s2 = inlined_call_operand.vmem [shape: f32[9,256], index: 2, kind: input, shape index: {}]
  %s3 = inlined_call_operand.vmem [shape: f32[2,8,256], index: 3, kind: output, shape index: {0}]
  %s4 = inlined_call_operand.vmem [shape: f32[2,16,1], index: 4, kind: output, shape index: {1}]
  %5 = xla_tuple %s3, %s4
  %s6 = sld [smem:[#allocation0]]
  $region53: #{double_conv.3} parent=0
    _
  %s8 = ssub.s32 1, %s6
  %s9 = scalar_select 0, %s8, %s6
  loop: start=0, step=1, limit=4
  $region2: #{double_conv.3} parent=0 // loop_pre_header
    _
  $region3: #{double_conv.3} parent=0 // loop_header
    %s11 = sphi 0, %s15
    %p12 = scmp.ge.s32.totalorder %s11, 4
    %s21 = sphi 0, %s23
    %s24 = sphi 0, %s21
    %s25 = sphi 0, %s24
    %s41 = sphi 0, %s25
    %s45 = sphi 0, %s45
    %s47 = sphi 0, %s45
    %s48 = sphi 0, %s47
    %s62 = sphi 0, %s48
    %s66 = sphi 0, %s66
    %s68 = sphi 0, %s66
    %s69 = sphi 0, %s68
    %s83 = sphi 0, %s69
    %s89 = sphi 0, %s91
    %s92 = sphi 0, %s89
    %s93 = sphi 0, %s92
    %s109 = sphi 0, %s93
    %s115 = sphi 0, %s117
    %s118 = sphi 0, %s115
    %s119 = sphi 0, %s118
    %s135 = sphi 0, %s119
  $region4: #{double_conv.3} parent=0 // loop_header_branch
    %14 = sbr.rel (%p12) target = $region8
  $region5: #{double_conv.3} parent=0 // loop_body
    %s16 = ssub.s32 %s11, 1
    %s17 = ssub.s32 %s11, 2
    %s18 = sadd.s32 %s11, 1
    %s19 = ssub.s32 %s11, %s18
    %p20 = scmp.eq.s32.totalorder %s19, 0
    %s22 = sadd.s32 %s21, 1
    %s23 = scalar_select %p20, %s21, %s22
    %p26 = pneg %p20
    %p27 = scmp.eq.s32.totalorder %s11, 1
    %p28 = por %p26, %p27
    %p29 = scmp.ne.s32.totalorder %s21, %s24
    %p30 = scmp.eq.s32.totalorder %s11, 0
    %p31 = por %p29, %p30
    %p32 = scmp.ne.s32.totalorder %s21, %s24
    %p33 = scmp.eq.s32.totalorder %s16, 1
    %p34 = por %p32, %p33
    %p35 = scmp.ne.s32.totalorder %s24, %s25
    %p36 = scmp.eq.s32.totalorder %s16, 0
    %p37 = por %p35, %p36
    %p38 = scmp.ne.s32.totalorder %s24, %s25
    %p39 = scmp.eq.s32.totalorder %s17, 1
    %p40 = por %p38, %p39
    %p42 = scmp.ne.s32.totalorder %s25, %s41
    %p43 = scmp.eq.s32.totalorder %s17, 0
    %p44 = por %p42, %p43
    %s46 = sadd.s32 %s45, 1
    %p49 = scmp.eq.s32.totalorder %s11, 1
    %p50 = scmp.ne.s32.totalorder %s45, %s47
    %p51 = scmp.eq.s32.totalorder %s11, 0
    %p52 = por %p50, %p51
    %p53 = scmp.ne.s32.totalorder %s45, %s47
    %p54 = scmp.eq.s32.totalorder %s16, 1
    %p55 = por %p53, %p54
    %p56 = scmp.ne.s32.totalorder %s47, %s48
    %p57 = scmp.eq.s32.totalorder %s16, 0
    %p58 = por %p56, %p57
    %p59 = scmp.ne.s32.totalorder %s47, %s48
    %p60 = scmp.eq.s32.totalorder %s17, 1
    %p61 = por %p59, %p60
    %p63 = scmp.ne.s32.totalorder %s48, %s62
    %p64 = scmp.eq.s32.totalorder %s17, 0
    %p65 = por %p63, %p64
    %s67 = sadd.s32 %s66, 1
    %p70 = scmp.eq.s32.totalorder %s11, 1
    %p71 = scmp.ne.s32.totalorder %s66, %s68
    %p72 = scmp.eq.s32.totalorder %s11, 0
    %p73 = por %p71, %p72
    %p74 = scmp.ne.s32.totalorder %s66, %s68
    %p75 = scmp.eq.s32.totalorder %s16, 1
    %p76 = por %p74, %p75
    %p77 = scmp.ne.s32.totalorder %s68, %s69
    %p78 = scmp.eq.s32.totalorder %s16, 0
    %p79 = por %p77, %p78
    %p80 = scmp.ne.s32.totalorder %s68, %s69
    %p81 = scmp.eq.s32.totalorder %s17, 1
    %p82 = por %p80, %p81
    %p84 = scmp.ne.s32.totalorder %s69, %s83
    %p85 = scmp.eq.s32.totalorder %s17, 0
    %p86 = por %p84, %p85
    %s87 = ssub.s32 %s11, %s18
    %p88 = scmp.eq.s32.totalorder %s87, 0
    %s90 = sadd.s32 %s89, 1
    %s91 = scalar_select %p88, %s89, %s90
    %p94 = pneg %p88
    %p95 = scmp.eq.s32.totalorder %s11, 1
    %p96 = por %p94, %p95
    %p97 = scmp.ne.s32.totalorder %s89, %s92
    %p98 = scmp.eq.s32.totalorder %s11, 0
    %p99 = por %p97, %p98
    %p100 = scmp.ne.s32.totalorder %s89, %s92
    %p101 = scmp.eq.s32.totalorder %s16, 1
    %p102 = por %p100, %p101
    %p103 = scmp.ne.s32.totalorder %s92, %s93
    %p104 = scmp.eq.s32.totalorder %s16, 0
    %p105 = por %p103, %p104
    %p106 = scmp.ne.s32.totalorder %s92, %s93
    %p107 = scmp.eq.s32.totalorder %s17, 1
    %p108 = por %p106, %p107
    %p110 = scmp.ne.s32.totalorder %s93, %s109
    %p111 = scmp.eq.s32.totalorder %s17, 0
    %p112 = por %p110, %p111
    %s113 = ssub.s32 %s11, %s18
    %p114 = scmp.eq.s32.totalorder %s113, 0
    %s116 = sadd.s32 %s115, 1
    %s117 = scalar_select %p114, %s115, %s116
    %p120 = pneg %p114
    %p121 = scmp.eq.s32.totalorder %s11, 1
    %p122 = por %p120, %p121
    %p123 = scmp.ne.s32.totalorder %s115, %s118
    %p124 = scmp.eq.s32.totalorder %s11, 0
    %p125 = por %p123, %p124
    %p126 = scmp.ne.s32.totalorder %s115, %s118
    %p127 = scmp.eq.s32.totalorder %s16, 1
    %p128 = por %p126, %p127
    %p129 = scmp.ne.s32.totalorder %s118, %s119
    %p130 = scmp.eq.s32.totalorder %s16, 0
    %p131 = por %p129, %p130
    %p132 = scmp.ne.s32.totalorder %s118, %s119
    %p133 = scmp.eq.s32.totalorder %s17, 1
    %p134 = por %p132, %p133
    %p136 = scmp.ne.s32.totalorder %s119, %s135
    %p137 = scmp.eq.s32.totalorder %s17, 0
    %p138 = por %p136, %p137
    %p139 = scmp.le.s32.totalorder 1, %s11
    %p140 = scmp.lt.s32.totalorder %s11, 3
    %p141 = pnand %p139, %p140
    %p142 = pneg %p141
    // Predicated region
    $region9: #{double_conv.3} parent=5 // pred_check
      _
    $region10: #{double_conv.3} parent=5 // pred_check_branch
      %144 = sbr.rel (%p141) target = $region12
    $region11: #{double_conv.3} parent=5 // pred_region
      %s145 = ssub.s32 %s11, 1
      // Predicated region
      $region13: #{double_conv.3} parent=11 // pred_check
        %p146 = pneg %p58
      $region14: #{double_conv.3} parent=11 // pred_check_branch
        %148 = sbr.rel (%p146) target = $region16
      $region15: #{double_conv.3} parent=11 // pred_region
        _
      $region16: #{double_conv.3} parent=11 // pred_fallthru
        _
      // Predicated region
      $region17: #{double_conv.3} parent=11 // pred_check
        %p149 = pneg %p79
      $region18: #{double_conv.3} parent=11 // pred_check_branch
        %151 = sbr.rel (%p149) target = $region20
      $region19: #{double_conv.3} parent=11 // pred_region
        _
      $region20: #{double_conv.3} parent=11 // pred_fallthru
        _
    $region12: #{double_conv.3} parent=5 // pred_fallthru
      _
    %p152 = scmp.lt.s32.totalorder %s11, 2
    // Predicated region
    $region21: #{double_conv.3} parent=5 // pred_check
      %p153 = pneg %p152
    $region22: #{double_conv.3} parent=5 // pred_check_branch
      %155 = sbr.rel (%p153) target = $region24
    $region23: #{double_conv.3} parent=5 // pred_region
      // Predicated region
      $region25: #{double_conv.3} parent=23 // pred_check
        %p156 = pneg %p31
      $region26: #{double_conv.3} parent=23 // pred_check_branch
        %158 = sbr.rel (%p156) target = $region28
      $region27: #{double_conv.3} parent=23 // pred_region
        %p159 = scmp.lt.s32.totalorder %s11, 1
        %s160 = scalar_select %p159, %s11, 1
        %s161 = smul.addr %s160, 2
        %s162 = smul.addr %s161, 4
        %s163 = scalar_lea.vmem %s0, %s162
      $region28: #{double_conv.3} parent=23 // pred_fallthru
        _
    $region24: #{double_conv.3} parent=5 // pred_fallthru
      _
    %p164 = scmp.le.s32.totalorder 1, %s11
    %p165 = scmp.lt.s32.totalorder %s11, 3
    %p166 = pnand %p164, %p165
    %p167 = pneg %p166
    // Predicated region
    $region29: #{double_conv.3} parent=5 // pred_check
      _
    $region30: #{double_conv.3} parent=5 // pred_check_branch
      %169 = sbr.rel (%p166) target = $region32
    $region31: #{double_conv.3} parent=5 // pred_region
      %s170 = ssub.s32 %s11, 1
      %p171 = scmp.lt.s32.totalorder %s16, 1
      %s172 = scalar_select %p171, %s16, 1
      %s173 = smul.addr %s172, 2
      %s174 = smul.addr %s173, 4
      %s175 = scalar_lea.vmem %s0, %s174
      %p176 = pneg %p37
      %p177 = pneg %p34
      %p178 = pneg %p58
      %p179 = pneg %p55
      %p180 = pneg %p79
      %p181 = pneg %p76
      %p182 = pneg %p105
      %p183 = pneg %p102
      %p184 = scmp.lt.s32.totalorder %s16, 1
      %s185 = scalar_select %p184, %s16, 1
      %s186 = smul.addr %s185, 2
      %s187 = smul.addr %s186, 8
      %s188 = scalar_lea.vmem %s3, %s187
      %p189 = pneg %p131
      %p190 = pneg %p128
      %p191 = scmp.lt.s32.totalorder %s16, 1
      %s192 = scalar_select %p191, %s16, 1
      %s193 = smul.addr %s192, 2
      %s194 = smul.addr %s193, 8
      %s195 = scalar_lea.vmem %s4, %s194
      %p196 = scmp.lt.s32.totalorder %s16, 1
      %s197 = scalar_select %p196, %s16, 1
      %s198 = smul.addr %s197, 2
      %s199 = smul.addr %s198, 4
      %s200 = scalar_lea.vmem %s0, %s199
      %p201 = scmp.lt.s32.totalorder %s16, 1
      %s202 = scalar_select %p201, %s16, 1
      %s203 = smul.addr %s202, 2
      %s204 = smul.addr %s203, 8
      %s205 = scalar_lea.vmem %s3, %s204
      %p206 = scmp.lt.s32.totalorder %s16, 1
      %s207 = scalar_select %p206, %s16, 1
      %s208 = smul.addr %s207, 2
      %s209 = smul.addr %s208, 8
      %s210 = scalar_lea.vmem %s4, %s209
      %v211 = vld [vmem:[%s200] sm:$0xff]
      %213 = vst [vmem:[#allocation1] ss:$2 sm:$0xff] %v211
      %v214 = vld.sshfl [vmem:[#allocation1] sm:$0xff pattern:$0x75316420]
      %v215 = vld.sshfl [vmem:[#allocation1 + $0x8] sm:$0xff pattern:$0x75316420]
      %218 = vrot.lane.b32.xlu0 %v214, 17
      %v219 = vpop.permute.xlu0 %218
      %220 = vrot.lane.b32.xlu0 %v215, 17
      %v221 = vpop.permute.xlu0 %220
      %v222 = vlaneseq
      %v223 = vand.u32 %v222, 127
      %vm224 = vcmp.lt.s32.totalorder %v223, 17
      %v225 = vsel %vm224, %v219, %v221
      %v226 = vsel %vm224, %v221, %v219
      %v227 = vld [vmem:[%s2] ss:$8 sm:$0x3]
      %v229 = vperm.slane %v227, 0
      %v230 = vperm.slane %v227, 1
      %v233 = vmul.f32 %v226, %v229
      %v234 = vmul.f32 %v225, %v230
      %v235 = vld [vmem:[%s1] sm:$0xff]
      %236 = vst [vmem:[#allocation1] ss:$2 sm:$0xff] %v211
      %v237 = vld.sshfl [vmem:[#allocation1] sm:$0xff pattern:$0x75316420]
      %v238 = vld.sshfl [vmem:[#allocation1 + $0x8] sm:$0xff pattern:$0x75316420]
      %241 = vrot.lane.b32.xlu0 %v237, 16
      %v242 = vpop.permute.xlu0 %241
      %243 = vrot.lane.b32.xlu0 %v238, 16
      %v244 = vpop.permute.xlu0 %243
      %vm245 = vcmp.lt.s32.totalorder %v223, 16
      %v246 = vsel %vm245, %v242, %v244
      %v247 = vsel %vm245, %v244, %v242
      %s248 = scalar_lea.vmem %s2, 1
      %v249 = vld [vmem:[%s248] ss:$8 sm:$0x3]
      %v251 = vperm.slane %v249, 0
      %v252 = vperm.slane %v249, 1
      %v255 = vmul.f32 %v247, %v251
      %v256 = vmul.f32 %v246, %v252
      %s257 = scalar_lea.vmem %s1, 8
      %v258 = vld [vmem:[%s257] sm:$0xff]
      %vm259 = vcmask 31744
      %v261 = vsel %vm259, %v258, 0
      %vm263 = vcmask 1043456
      %v265 = vsel %vm263, %v255, 0
      %v268 = vsel %vm263, %v256, 0
      %270 = vmatpush.msra.mxu0 0.0
      %271 = vmatpush.msra.mxu0 0.0
      %272 = vmatpush.msra.mxu0 0.0
      %273 = vmatpush.msra.mxu0 0.0
      %274 = vmatpush.msra.mxu0 0.0
      %275 = vmatpush.msra.mxu0 0.0
      %276 = vmatpush.msra.mxu0 0.0
      %277 = vmatpush.msra.mxu0 0.0
      %278 = vmatpush.msra.mxu0 0.0
      %279 = vmatpush.msra.mxu0 0.0
      %280 = vmatpush.msra.mxu0 0.0
      %281 = vmatpush.msra.mxu0 0.0
      %282 = vmatpush.msra.mxu0 0.0
      %283 = vmatpush.msra.mxu0 0.0
      %284 = vmatpush.msra.mxu0 0.0
      %285 = vmatpush.msra.mxu0 %v265
      %286 = vmatmul.f32.gmra.mxu0 %v261
      %v287 = vpop.f32.mrf.mxu0
      %v288 = vadd.f32 0.0, %v287
      %289 = vdwg.mxu0
      %290 = vmatpush.msra.mxu0 0.0
      %291 = vmatpush.msra.mxu0 0.0
      %292 = vmatpush.msra.mxu0 0.0
      %293 = vmatpush.msra.mxu0 0.0
      %294 = vmatpush.msra.mxu0 0.0
      %295 = vmatpush.msra.mxu0 0.0
      %296 = vmatpush.msra.mxu0 0.0
      %297 = vmatpush.msra.mxu0 0.0
      %298 = vmatpush.msra.mxu0 0.0
      %299 = vmatpush.msra.mxu0 0.0
      %300 = vmatpush.msra.mxu0 0.0
      %301 = vmatpush.msra.mxu0 0.0
      %302 = vmatpush.msra.mxu0 0.0
      %303 = vmatpush.msra.mxu0 0.0
      %304 = vmatpush.msra.mxu0 0.0
      %305 = vmatpush.msra.mxu0 %v268
      %306 = vmatmul.f32.gmra.mxu0 %v261
      %v307 = vpop.f32.mrf.mxu0
      %v308 = vadd.f32 0.0, %v307
      %309 = vdwg.mxu0
      %v311 = vsel %vm259, %v235, 0
      %v314 = vsel %vm263, %v233, 0
      %v317 = vsel %vm263, %v234, 0
      %319 = vmatpush.msra.mxu0 0.0
      %320 = vmatpush.msra.mxu0 0.0
      %321 = vmatpush.msra.mxu0 0.0
      %322 = vmatpush.msra.mxu0 0.0
      %323 = vmatpush.msra.mxu0 0.0
      %324 = vmatpush.msra.mxu0 0.0
      %325 = vmatpush.msra.mxu0 0.0
      %326 = vmatpush.msra.mxu0 0.0
      %327 = vmatpush.msra.mxu0 0.0
      %328 = vmatpush.msra.mxu0 0.0
      %329 = vmatpush.msra.mxu0 0.0
      %330 = vmatpush.msra.mxu0 0.0
      %331 = vmatpush.msra.mxu0 0.0
      %332 = vmatpush.msra.mxu0 0.0
      %333 = vmatpush.msra.mxu0 0.0
      %334 = vmatpush.msra.mxu0 %v314
      %335 = vmatmul.f32.gmra.mxu0 %v311
      %v336 = vpop.f32.mrf.mxu0
      %v337 = vadd.f32 %v288, %v336
      %338 = vdwg.mxu0
      %339 = vmatpush.msra.mxu0 0.0
      %340 = vmatpush.msra.mxu0 0.0
      %341 = vmatpush.msra.mxu0 0.0
      %342 = vmatpush.msra.mxu0 0.0
      %343 = vmatpush.msra.mxu0 0.0
      %344 = vmatpush.msra.mxu0 0.0
      %345 = vmatpush.msra.mxu0 0.0
      %346 = vmatpush.msra.mxu0 0.0
      %347 = vmatpush.msra.mxu0 0.0
      %348 = vmatpush.msra.mxu0 0.0
      %349 = vmatpush.msra.mxu0 0.0
      %350 = vmatpush.msra.mxu0 0.0
      %351 = vmatpush.msra.mxu0 0.0
      %352 = vmatpush.msra.mxu0 0.0
      %353 = vmatpush.msra.mxu0 0.0
      %354 = vmatpush.msra.mxu0 %v317
      %355 = vmatmul.f32.gmra.mxu0 %v311
      %v356 = vpop.f32.mrf.mxu0
      %v357 = vadd.f32 %v308, %v356
      %358 = vdwg.mxu0
      %359 = vst [vmem:[#allocation1] ss:$2 sm:$0xff] %v211
      %v360 = vld.sshfl [vmem:[#allocation1] sm:$0xff pattern:$0x75316420]
      %v361 = vld.sshfl [vmem:[#allocation1 + $0x8] sm:$0xff pattern:$0x75316420]
      %364 = vrot.lane.b32.xlu0 %v360, 15
      %v365 = vpop.permute.xlu0 %364
      %366 = vrot.lane.b32.xlu0 %v361, 15
      %v367 = vpop.permute.xlu0 %366
      %vm368 = vcmp.lt.s32.totalorder %v223, 15
      %v369 = vsel %vm368, %v365, %v367
      %v370 = vsel %vm368, %v367, %v365
      %s371 = scalar_lea.vmem %s2, 2
      %v372 = vld [vmem:[%s371] ss:$8 sm:$0x3]
      %v374 = vperm.slane %v372, 0
      %v375 = vperm.slane %v372, 1
      %v378 = vmul.f32 %v370, %v374
      %v379 = vmul.f32 %v369, %v375
      %s380 = scalar_lea.vmem %s1, 16
      %v381 = vld [vmem:[%s380] sm:$0xff]
      %v383 = vsel %vm259, %v381, 0
      %v386 = vsel %vm263, %v378, 0
      %v389 = vsel %vm263, %v379, 0
      %391 = vmatpush.msra.mxu0 0.0
      %392 = vmatpush.msra.mxu0 0.0
      %393 = vmatpush.msra.mxu0 0.0
      %394 = vmatpush.msra.mxu0 0.0
      %395 = vmatpush.msra.mxu0 0.0
      %396 = vmatpush.msra.mxu0 0.0
      %397 = vmatpush.msra.mxu0 0.0
      %398 = vmatpush.msra.mxu0 0.0
      %399 = vmatpush.msra.mxu0 0.0
      %400 = vmatpush.msra.mxu0 0.0
      %401 = vmatpush.msra.mxu0 0.0
      %402 = vmatpush.msra.mxu0 0.0
      %403 = vmatpush.msra.mxu0 0.0
      %404 = vmatpush.msra.mxu0 0.0
      %405 = vmatpush.msra.mxu0 0.0
      %406 = vmatpush.msra.mxu0 %v386
      %407 = vmatmul.f32.gmra.mxu0 %v383
      %v408 = vpop.f32.mrf.mxu0
      %v409 = vadd.f32 0.0, %v408
      %410 = vdwg.mxu0
      %411 = vmatpush.msra.mxu0 0.0
      %412 = vmatpush.msra.mxu0 0.0
      %413 = vmatpush.msra.mxu0 0.0
      %414 = vmatpush.msra.mxu0 0.0
      %415 = vmatpush.msra.mxu0 0.0
      %416 = vmatpush.msra.mxu0 0.0
      %417 = vmatpush.msra.mxu0 0.0
      %418 = vmatpush.msra.mxu0 0.0
      %419 = vmatpush.msra.mxu0 0.0
      %420 = vmatpush.msra.mxu0 0.0
      %421 = vmatpush.msra.mxu0 0.0
      %422 = vmatpush.msra.mxu0 0.0
      %423 = vmatpush.msra.mxu0 0.0
      %424 = vmatpush.msra.mxu0 0.0
      %425 = vmatpush.msra.mxu0 0.0
      %426 = vmatpush.msra.mxu0 %v389
      %427 = vmatmul.f32.gmra.mxu0 %v383
      %v428 = vpop.f32.mrf.mxu0
      %v429 = vadd.f32 0.0, %v428
      %430 = vdwg.mxu0
      %v431 = vadd.f32 %v337, %v409
      %v432 = vadd.f32 %v357, %v429
      %433 = vst [vmem:[#allocation1] ss:$2 sm:$0xff] %v211
      %v434 = vld.sshfl [vmem:[#allocation1] sm:$0xff pattern:$0x75316420]
      %v435 = vld.sshfl [vmem:[#allocation1 + $0x8] sm:$0xff pattern:$0x75316420]
      %438 = vrot.lane.b32.xlu0 %v434, 1
      %v439 = vpop.permute.xlu0 %438
      %440 = vrot.lane.b32.xlu0 %v435, 1
      %v441 = vpop.permute.xlu0 %440
      %vm442 = vcmp.lt.s32.totalorder %v223, 1
      %v443 = vsel %vm442, %v439, %v441
      %v444 = vsel %vm442, %v441, %v439
      %s445 = scalar_lea.vmem %s2, 3
      %v446 = vld [vmem:[%s445] ss:$8 sm:$0x3]
      %v448 = vperm.slane %v446, 0
      %v449 = vperm.slane %v446, 1
      %v452 = vmul.f32 %v444, %v448
      %v453 = vmul.f32 %v443, %v449
      %s454 = scalar_lea.vmem %s1, 24
      %v455 = vld [vmem:[%s454] sm:$0xff]
      %v457 = vsel %vm259, %v455, 0
      %v460 = vsel %vm263, %v452, 0
      %v463 = vsel %vm263, %v453, 0
      %465 = vmatpush.msra.mxu0 0.0
      %466 = vmatpush.msra.mxu0 0.0
      %467 = vmatpush.msra.mxu0 0.0
      %468 = vmatpush.msra.mxu0 0.0
      %469 = vmatpush.msra.mxu0 0.0
      %470 = vmatpush.msra.mxu0 0.0
      %471 = vmatpush.msra.mxu0 0.0
      %472 = vmatpush.msra.mxu0 0.0
      %473 = vmatpush.msra.mxu0 0.0
      %474 = vmatpush.msra.mxu0 0.0
      %475 = vmatpush.msra.mxu0 0.0
      %476 = vmatpush.msra.mxu0 0.0
      %477 = vmatpush.msra.mxu0 0.0
      %478 = vmatpush.msra.mxu0 0.0
      %479 = vmatpush.msra.mxu0 0.0
      %480 = vmatpush.msra.mxu0 %v460
      %481 = vmatmul.f32.gmra.mxu0 %v457
      %v482 = vpop.f32.mrf.mxu0
      %v483 = vadd.f32 0.0, %v482
      %484 = vdwg.mxu0
      %485 = vmatpush.msra.mxu0 0.0
      %486 = vmatpush.msra.mxu0 0.0
      %487 = vmatpush.msra.mxu0 0.0
      %488 = vmatpush.msra.mxu0 0.0
      %489 = vmatpush.msra.mxu0 0.0
      %490 = vmatpush.msra.mxu0 0.0
      %491 = vmatpush.msra.mxu0 0.0
      %492 = vmatpush.msra.mxu0 0.0
      %493 = vmatpush.msra.mxu0 0.0
      %494 = vmatpush.msra.mxu0 0.0
      %495 = vmatpush.msra.mxu0 0.0
      %496 = vmatpush.msra.mxu0 0.0
      %497 = vmatpush.msra.mxu0 0.0
      %498 = vmatpush.msra.mxu0 0.0
      %499 = vmatpush.msra.mxu0 0.0
      %500 = vmatpush.msra.mxu0 %v463
      %501 = vmatmul.f32.gmra.mxu0 %v457
      %v502 = vpop.f32.mrf.mxu0
      %v503 = vadd.f32 0.0, %v502
      %504 = vdwg.mxu0
      %v505 = vadd.f32 %v431, %v483
      %v506 = vadd.f32 %v432, %v503
      %s507 = scalar_lea.vmem %s1, 32
      %v508 = vld [vmem:[%s507] sm:$0xff]
      %509 = vst [vmem:[#allocation1] ss:$2 sm:$0xff] %v211
      %v510 = vld.sshfl [vmem:[#allocation1] sm:$0xff pattern:$0x75316420]
      %v511 = vld.sshfl [vmem:[#allocation1 + $0x8] sm:$0xff pattern:$0x75316420]
      %v513 = vsel %vm259, %v508, 0
      %v515 = vsel %vm263, %v510, 0
      %v517 = vsel %vm263, %v511, 0
      %519 = vmatpush.msra.mxu0 0.0
      %520 = vmatpush.msra.mxu0 0.0
      %521 = vmatpush.msra.mxu0 0.0
      %522 = vmatpush.msra.mxu0 0.0
      %523 = vmatpush.msra.mxu0 0.0
      %524 = vmatpush.msra.mxu0 0.0
      %525 = vmatpush.msra.mxu0 0.0
      %526 = vmatpush.msra.mxu0 0.0
      %527 = vmatpush.msra.mxu0 0.0
      %528 = vmatpush.msra.mxu0 0.0
      %529 = vmatpush.msra.mxu0 0.0
      %530 = vmatpush.msra.mxu0 0.0
      %531 = vmatpush.msra.mxu0 0.0
      %532 = vmatpush.msra.mxu0 0.0
      %533 = vmatpush.msra.mxu0 0.0
      %534 = vmatpush.msra.mxu0 %v515
      %535 = vmatmul.f32.gmra.mxu0 %v513
      %v536 = vpop.f32.mrf.mxu0
      %v537 = vadd.f32 0.0, %v536
      %538 = vdwg.mxu0
      %539 = vmatpush.msra.mxu0 0.0
      %540 = vmatpush.msra.mxu0 0.0
      %541 = vmatpush.msra.mxu0 0.0
      %542 = vmatpush.msra.mxu0 0.0
      %543 = vmatpush.msra.mxu0 0.0
      %544 = vmatpush.msra.mxu0 0.0
      %545 = vmatpush.msra.mxu0 0.0
      %546 = vmatpush.msra.mxu0 0.0
      %547 = vmatpush.msra.mxu0 0.0
      %548 = vmatpush.msra.mxu0 0.0
      %549 = vmatpush.msra.mxu0 0.0
      %550 = vmatpush.msra.mxu0 0.0
      %551 = vmatpush.msra.mxu0 0.0
      %552 = vmatpush.msra.mxu0 0.0
      %553 = vmatpush.msra.mxu0 0.0
      %554 = vmatpush.msra.mxu0 %v517
      %555 = vmatmul.f32.gmra.mxu0 %v513
      %v556 = vpop.f32.mrf.mxu0
      %v557 = vadd.f32 0.0, %v556
      %558 = vdwg.mxu0
      %v559 = vadd.f32 %v505, %v537
      %v560 = vadd.f32 %v506, %v557
      %561 = vst [vmem:[#allocation1] ss:$2 sm:$0xff] %v211
      %v562 = vld.sshfl [vmem:[#allocation1] sm:$0xff pattern:$0x75316420]
      %v563 = vld.sshfl [vmem:[#allocation1 + $0x8] sm:$0xff pattern:$0x75316420]
      %566 = vrot.lane.b32.xlu0 %v562, 127
      %v567 = vpop.permute.xlu0 %566
      %568 = vrot.lane.b32.xlu0 %v563, 127
      %v569 = vpop.permute.xlu0 %568
      %vm570 = vcmp.lt.s32.totalorder %v223, 127
      %v571 = vsel %vm570, %v567, %v569
      %v572 = vsel %vm570, %v569, %v567
      %s573 = scalar_lea.vmem %s2, 5
      %v574 = vld [vmem:[%s573] ss:$8 sm:$0x3]
      %v576 = vperm.slane %v574, 0
      %v577 = vperm.slane %v574, 1
      %v580 = vmul.f32 %v571, %v576
      %v581 = vmul.f32 %v572, %v577
      %s582 = scalar_lea.vmem %s1, 40
      %v583 = vld [vmem:[%s582] sm:$0xff]
      %v585 = vsel %vm259, %v583, 0
      %v588 = vsel %vm263, %v580, 0
      %v591 = vsel %vm263, %v581, 0
      %593 = vmatpush.msra.mxu0 0.0
      %594 = vmatpush.msra.mxu0 0.0
      %595 = vmatpush.msra.mxu0 0.0
      %596 = vmatpush.msra.mxu0 0.0
      %597 = vmatpush.msra.mxu0 0.0
      %598 = vmatpush.msra.mxu0 0.0
      %599 = vmatpush.msra.mxu0 0.0
      %600 = vmatpush.msra.mxu0 0.0
      %601 = vmatpush.msra.mxu0 0.0
      %602 = vmatpush.msra.mxu0 0.0
      %603 = vmatpush.msra.mxu0 0.0
      %604 = vmatpush.msra.mxu0 0.0
      %605 = vmatpush.msra.mxu0 0.0
      %606 = vmatpush.msra.mxu0 0.0
      %607 = vmatpush.msra.mxu0 0.0
      %608 = vmatpush.msra.mxu0 %v588
      %609 = vmatmul.f32.gmra.mxu0 %v585
      %v610 = vpop.f32.mrf.mxu0
      %v611 = vadd.f32 0.0, %v610
      %612 = vdwg.mxu0
      %613 = vmatpush.msra.mxu0 0.0
      %614 = vmatpush.msra.mxu0 0.0
      %615 = vmatpush.msra.mxu0 0.0
      %616 = vmatpush.msra.mxu0 0.0
      %617 = vmatpush.msra.mxu0 0.0
      %618 = vmatpush.msra.mxu0 0.0
      %619 = vmatpush.msra.mxu0 0.0
      %620 = vmatpush.msra.mxu0 0.0
      %621 = vmatpush.msra.mxu0 0.0
      %622 = vmatpush.msra.mxu0 0.0
      %623 = vmatpush.msra.mxu0 0.0
      %624 = vmatpush.msra.mxu0 0.0
      %625 = vmatpush.msra.mxu0 0.0
      %626 = vmatpush.msra.mxu0 0.0
      %627 = vmatpush.msra.mxu0 0.0
      %628 = vmatpush.msra.mxu0 %v591
      %629 = vmatmul.f32.gmra.mxu0 %v585
      %v630 = vpop.f32.mrf.mxu0
      %v631 = vadd.f32 0.0, %v630
      %632 = vdwg.mxu0
      %v633 = vadd.f32 %v559, %v611
      %v634 = vadd.f32 %v560, %v631
      %635 = vst [vmem:[#allocation1] ss:$2 sm:$0xff] %v211
      %v636 = vld.sshfl [vmem:[#allocation1] sm:$0xff pattern:$0x75316420]
      %v637 = vld.sshfl [vmem:[#allocation1 + $0x8] sm:$0xff pattern:$0x75316420]
      %640 = vrot.lane.b32.xlu0 %v636, 113
      %v641 = vpop.permute.xlu0 %640
      %642 = vrot.lane.b32.xlu0 %v637, 113
      %v643 = vpop.permute.xlu0 %642
      %vm644 = vcmp.lt.s32.totalorder %v223, 113
      %v645 = vsel %vm644, %v641, %v643
      %v646 = vsel %vm644, %v643, %v641
      %s647 = scalar_lea.vmem %s2, 6
      %v648 = vld [vmem:[%s647] ss:$8 sm:$0x3]
      %v650 = vperm.slane %v648, 0
      %v651 = vperm.slane %v648, 1
      %v654 = vmul.f32 %v645, %v650
      %v655 = vmul.f32 %v646, %v651
      %s656 = scalar_lea.vmem %s1, 48
      %v657 = vld [vmem:[%s656] sm:$0xff]
      %v659 = vsel %vm259, %v657, 0
      %v662 = vsel %vm263, %v654, 0
      %v665 = vsel %vm263, %v655, 0
      %667 = vmatpush.msra.mxu0 0.0
      %668 = vmatpush.msra.mxu0 0.0
      %669 = vmatpush.msra.mxu0 0.0
      %670 = vmatpush.msra.mxu0 0.0
      %671 = vmatpush.msra.mxu0 0.0
      %672 = vmatpush.msra.mxu0 0.0
      %673 = vmatpush.msra.mxu0 0.0
      %674 = vmatpush.msra.mxu0 0.0
      %675 = vmatpush.msra.mxu0 0.0
      %676 = vmatpush.msra.mxu0 0.0
      %677 = vmatpush.msra.mxu0 0.0
      %678 = vmatpush.msra.mxu0 0.0
      %679 = vmatpush.msra.mxu0 0.0
      %680 = vmatpush.msra.mxu0 0.0
      %681 = vmatpush.msra.mxu0 0.0
      %682 = vmatpush.msra.mxu0 %v662
      %683 = vmatmul.f32.gmra.mxu0 %v659
      %v684 = vpop.f32.mrf.mxu0
      %v685 = vadd.f32 0.0, %v684
      %686 = vdwg.mxu0
      %687 = vmatpush.msra.mxu0 0.0
      %688 = vmatpush.msra.mxu0 0.0
      %689 = vmatpush.msra.mxu0 0.0
      %690 = vmatpush.msra.mxu0 0.0
      %691 = vmatpush.msra.mxu0 0.0
      %692 = vmatpush.msra.mxu0 0.0
      %693 = vmatpush.msra.mxu0 0.0
      %694 = vmatpush.msra.mxu0 0.0
      %695 = vmatpush.msra.mxu0 0.0
      %696 = vmatpush.msra.mxu0 0.0
      %697 = vmatpush.msra.mxu0 0.0
      %698 = vmatpush.msra.mxu0 0.0
      %699 = vmatpush.msra.mxu0 0.0
      %700 = vmatpush.msra.mxu0 0.0
      %701 = vmatpush.msra.mxu0 0.0
      %702 = vmatpush.msra.mxu0 %v665
      %703 = vmatmul.f32.gmra.mxu0 %v659
      %v704 = vpop.f32.mrf.mxu0
      %v705 = vadd.f32 0.0, %v704
      %706 = vdwg.mxu0
      %v707 = vadd.f32 %v633, %v685
      %v708 = vadd.f32 %v634, %v705
      %709 = vst [vmem:[#allocation1] ss:$2 sm:$0xff] %v211
      %v710 = vld.sshfl [vmem:[#allocation1] sm:$0xff pattern:$0x75316420]
      %v711 = vld.sshfl [vmem:[#allocation1 + $0x8] sm:$0xff pattern:$0x75316420]
      %714 = vrot.lane.b32.xlu0 %v710, 112
      %v715 = vpop.permute.xlu0 %714
      %716 = vrot.lane.b32.xlu0 %v711, 112
      %v717 = vpop.permute.xlu0 %716
      %vm718 = vcmp.lt.s32.totalorder %v223, 112
      %v719 = vsel %vm718, %v715, %v717
      %v720 = vsel %vm718, %v717, %v715
      %s721 = scalar_lea.vmem %s2, 7
      %v722 = vld [vmem:[%s721] ss:$8 sm:$0x3]
      %v724 = vperm.slane %v722, 0
      %v725 = vperm.slane %v722, 1
      %v728 = vmul.f32 %v719, %v724
      %v729 = vmul.f32 %v720, %v725
      %s730 = scalar_lea.vmem %s1, 56
      %v731 = vld [vmem:[%s730] sm:$0xff]
      %v733 = vsel %vm259, %v731, 0
      %v736 = vsel %vm263, %v728, 0
      %v739 = vsel %vm263, %v729, 0
      %741 = vmatpush.msra.mxu0 0.0
      %742 = vmatpush.msra.mxu0 0.0
      %743 = vmatpush.msra.mxu0 0.0
      %744 = vmatpush.msra.mxu0 0.0
      %745 = vmatpush.msra.mxu0 0.0
      %746 = vmatpush.msra.mxu0 0.0
      %747 = vmatpush.msra.mxu0 0.0
      %748 = vmatpush.msra.mxu0 0.0
      %749 = vmatpush.msra.mxu0 0.0
      %750 = vmatpush.msra.mxu0 0.0
      %751 = vmatpush.msra.mxu0 0.0
      %752 = vmatpush.msra.mxu0 0.0
      %753 = vmatpush.msra.mxu0 0.0
      %754 = vmatpush.msra.mxu0 0.0
      %755 = vmatpush.msra.mxu0 0.0
      %756 = vmatpush.msra.mxu0 %v736
      %757 = vmatmul.f32.gmra.mxu0 %v733
      %v758 = vpop.f32.mrf.mxu0
      %v759 = vadd.f32 0.0, %v758
      %760 = vdwg.mxu0
      %761 = vmatpush.msra.mxu0 0.0
      %762 = vmatpush.msra.mxu0 0.0
      %763 = vmatpush.msra.mxu0 0.0
      %764 = vmatpush.msra.mxu0 0.0
      %765 = vmatpush.msra.mxu0 0.0
      %766 = vmatpush.msra.mxu0 0.0
      %767 = vmatpush.msra.mxu0 0.0
      %768 = vmatpush.msra.mxu0 0.0
      %769 = vmatpush.msra.mxu0 0.0
      %770 = vmatpush.msra.mxu0 0.0
      %771 = vmatpush.msra.mxu0 0.0
      %772 = vmatpush.msra.mxu0 0.0
      %773 = vmatpush.msra.mxu0 0.0
      %774 = vmatpush.msra.mxu0 0.0
      %775 = vmatpush.msra.mxu0 0.0
      %776 = vmatpush.msra.mxu0 %v739
      %777 = vmatmul.f32.gmra.mxu0 %v733
      %v778 = vpop.f32.mrf.mxu0
      %v779 = vadd.f32 0.0, %v778
      %780 = vdwg.mxu0
      %v781 = vadd.f32 %v707, %v759
      %v782 = vadd.f32 %v708, %v779
      %783 = vst [vmem:[#allocation1] ss:$2 sm:$0xff] %v211
      %v784 = vld.sshfl [vmem:[#allocation1] sm:$0xff pattern:$0x75316420]
      %v785 = vld.sshfl [vmem:[#allocation1 + $0x8] sm:$0xff pattern:$0x75316420]
      %788 = vrot.lane.b32.xlu0 %v784, 111
      %v789 = vpop.permute.xlu0 %788
      %790 = vrot.lane.b32.xlu0 %v785, 111
      %v791 = vpop.permute.xlu0 %790
      %vm792 = vcmp.lt.s32.totalorder %v223, 111
      %v793 = vsel %vm792, %v789, %v791
      %v794 = vsel %vm792, %v791, %v789
      %s795 = scalar_lea.vmem %s2, 16
      %v796 = vld [vmem:[%s795] ss:$8 sm:$0x3]
      %v798 = vperm.slane %v796, 0
      %v799 = vperm.slane %v796, 1
      %v802 = vmul.f32 %v793, %v798
      %v803 = vmul.f32 %v794, %v799
      %s804 = scalar_lea.vmem %s1, 64
      %v805 = vld [vmem:[%s804] sm:$0xff]
      %v807 = vsel %vm259, %v805, 0
      %v810 = vsel %vm263, %v802, 0
      %v813 = vsel %vm263, %v803, 0
      %815 = vmatpush.msra.mxu0 0.0
      %816 = vmatpush.msra.mxu0 0.0
      %817 = vmatpush.msra.mxu0 0.0
      %818 = vmatpush.msra.mxu0 0.0
      %819 = vmatpush.msra.mxu0 0.0
      %820 = vmatpush.msra.mxu0 0.0
      %821 = vmatpush.msra.mxu0 0.0
      %822 = vmatpush.msra.mxu0 0.0
      %823 = vmatpush.msra.mxu0 0.0
      %824 = vmatpush.msra.mxu0 0.0
      %825 = vmatpush.msra.mxu0 0.0
      %826 = vmatpush.msra.mxu0 0.0
      %827 = vmatpush.msra.mxu0 0.0
      %828 = vmatpush.msra.mxu0 0.0
      %829 = vmatpush.msra.mxu0 0.0
      %830 = vmatpush.msra.mxu0 %v810
      %831 = vmatmul.f32.gmra.mxu0 %v807
      %v832 = vpop.f32.mrf.mxu0
      %v833 = vadd.f32 0.0, %v832
      %834 = vdwg.mxu0
      %835 = vmatpush.msra.mxu0 0.0
      %836 = vmatpush.msra.mxu0 0.0
      %837 = vmatpush.msra.mxu0 0.0
      %838 = vmatpush.msra.mxu0 0.0
      %839 = vmatpush.msra.mxu0 0.0
      %840 = vmatpush.msra.mxu0 0.0
      %841 = vmatpush.msra.mxu0 0.0
      %842 = vmatpush.msra.mxu0 0.0
      %843 = vmatpush.msra.mxu0 0.0
      %844 = vmatpush.msra.mxu0 0.0
      %845 = vmatpush.msra.mxu0 0.0
      %846 = vmatpush.msra.mxu0 0.0
      %847 = vmatpush.msra.mxu0 0.0
      %848 = vmatpush.msra.mxu0 0.0
      %849 = vmatpush.msra.mxu0 0.0
      %850 = vmatpush.msra.mxu0 %v813
      %851 = vmatmul.f32.gmra.mxu0 %v807
      %v852 = vpop.f32.mrf.mxu0
      %v853 = vadd.f32 0.0, %v852
      %854 = vdwg.mxu0
      %v855 = vadd.f32 %v781, %v833
      %v856 = vadd.f32 %v782, %v853
      %857 = vst [vmem:[%s205] sm:$0xff] %v855
      %858 = vst [vmem:[%s205 + $0x8] sm:$0xff] %v856
      %v859 = vadd.f32 %v855, %v856
      %860 = vadd.xlane.f32.xlu0 %v859
      %v861 = vpop.xlane.xlu0 %860
      %vm862 = vcmask 7168
      %863 = vst.msk [vmem:[%s210] sm:$0xff] %vm862, %v861
      %v864 = vmul.f32 %v855, %v855
      %v865 = vmul.f32 %v856, %v856
      %v866 = vadd.f32 %v864, %v865
      %867 = vadd.xlane.f32.xlu0 %v866
      %v868 = vpop.xlane.xlu0 %867
      %869 = vst.msk [vmem:[%s210 + $0x8] sm:$0xff] %vm862, %v868
      %p870 = scmp.lt.s32.totalorder %s16, 1
      %s871 = scalar_select %p870, %s16, 1
      %s872 = smul.addr %s871, 2
      %s873 = smul.addr %s872, 8
      %s874 = scalar_lea.vmem %s3, %s873
      %p875 = scmp.lt.s32.totalorder %s16, 1
      %s876 = scalar_select %p875, %s16, 1
      %s877 = smul.addr %s876, 2
      %s878 = smul.addr %s877, 8
      %s879 = scalar_lea.vmem %s4, %s878
      // Predicated region
      $region33: #{double_conv.3} parent=31 // pred_check
        %p880 = pneg %p102
      $region34: #{double_conv.3} parent=31 // pred_check_branch
        %882 = sbr.rel (%p880) target = $region36
      $region35: #{double_conv.3} parent=31 // pred_region
        _
      $region36: #{double_conv.3} parent=31 // pred_fallthru
        _
      // Predicated region
      $region37: #{double_conv.3} parent=31 // pred_check
        %p883 = pneg %p128
      $region38: #{double_conv.3} parent=31 // pred_check_branch
        %885 = sbr.rel (%p883) target = $region40
      $region39: #{double_conv.3} parent=31 // pred_region
        _
      $region40: #{double_conv.3} parent=31 // pred_fallthru
        _
    $region32: #{double_conv.3} parent=5 // pred_fallthru
      _
    %p886 = scmp.le.s32.totalorder 2, %s11
    // Predicated region
    $region41: #{double_conv.3} parent=5 // pred_check
      %p887 = pneg %p886
    $region42: #{double_conv.3} parent=5 // pred_check_branch
      %889 = sbr.rel (%p887) target = $region44
    $region43: #{double_conv.3} parent=5 // pred_region
      %s890 = ssub.s32 %s11, 2
      // Predicated region
      $region45: #{double_conv.3} parent=43 // pred_check
        %p891 = pneg %p108
      $region46: #{double_conv.3} parent=43 // pred_check_branch
        %893 = sbr.rel (%p891) target = $region48
      $region47: #{double_conv.3} parent=43 // pred_region
        %p894 = scmp.lt.s32.totalorder %s17, 1
        %s895 = scalar_select %p894, %s17, 1
        %s896 = smul.addr %s895, 2
        %s897 = smul.addr %s896, 8
        %s898 = scalar_lea.vmem %s3, %s897
      $region48: #{double_conv.3} parent=43 // pred_fallthru
        _
      // Predicated region
      $region49: #{double_conv.3} parent=43 // pred_check
        %p899 = pneg %p134
      $region50: #{double_conv.3} parent=43 // pred_check_branch
        %901 = sbr.rel (%p899) target = $region52
      $region51: #{double_conv.3} parent=43 // pred_region
        %p902 = scmp.lt.s32.totalorder %s17, 1
        %s903 = scalar_select %p902, %s17, 1
        %s904 = smul.addr %s903, 2
        %s905 = smul.addr %s904, 8
        %s906 = scalar_lea.vmem %s4, %s905
      $region52: #{double_conv.3} parent=43 // pred_fallthru
        _
    $region44: #{double_conv.3} parent=5 // pred_fallthru
      _
  $region6: #{double_conv.3} parent=0 // loop_footer
    %s15 = sadd.s32 1, %s11
  $region7: #{double_conv.3} parent=0 // loop_footer_branch
    %10 = sbr.rel target = $region3
  $region8: #{double_conv.3} parent=0 // loop_exit
    _

// kernel: double_conv.4
$region0: #{double_conv.4}
  #allocation0 [shape = 'u32[]', space=smem, size = 0x4, offset = 0x4, fixed_abs, tag = 'smem constant byte address 0x4 - core index']
  #allocation1 [shape = 'u32[72,128]{1,0:T(1,128)}', space=vmem, size = 0x9000, scoped, tag = 'internal scratch']
  %s0 = inlined_call_operand.vmem [shape: f32[2,8,256], index: 0, kind: input, shape index: {}]
  %s1 = inlined_call_operand.vmem [shape: f32[8,1], index: 1, kind: input, shape index: {}]
  %s2 = inlined_call_operand.vmem [shape: f32[8,1], index: 2, kind: input, shape index: {}]
  %s3 = inlined_call_operand.vmem [shape: f32[9,8,8], index: 3, kind: input, shape index: {}]
  %s4 = inlined_call_operand.vmem [shape: f32[9,256], index: 4, kind: input, shape index: {}]
  %s5 = inlined_call_operand.vmem [shape: f32[2,8,256], index: 5, kind: output, shape index: {0}]
  %s6 = inlined_call_operand.vmem [shape: f32[2,16,1], index: 6, kind: output, shape index: {1}]
  %7 = xla_tuple %s5, %s6
  %s8 = sld [smem:[#allocation0]]
  $region61: #{double_conv.4} parent=0
    _
  %s10 = ssub.s32 1, %s8
  %s11 = scalar_select 0, %s10, %s8
  loop: start=0, step=1, limit=4
  $region2: #{double_conv.4} parent=0 // loop_pre_header
    _
  $region3: #{double_conv.4} parent=0 // loop_header
    %s13 = sphi 0, %s17
    %p14 = scmp.ge.s32.totalorder %s13, 4
    %s23 = sphi 0, %s25
    %s26 = sphi 0, %s23
    %s27 = sphi 0, %s26
    %s43 = sphi 0, %s27
    %s47 = sphi 0, %s47
    %s49 = sphi 0, %s47
    %s50 = sphi 0, %s49
    %s64 = sphi 0, %s50
    %s68 = sphi 0, %s68
    %s70 = sphi 0, %s68
    %s71 = sphi 0, %s70
    %s85 = sphi 0, %s71
    %s89 = sphi 0, %s89
    %s91 = sphi 0, %s89
    %s92 = sphi 0, %s91
    %s106 = sphi 0, %s92
    %s110 = sphi 0, %s110
    %s112 = sphi 0, %s110
    %s113 = sphi 0, %s112
    %s127 = sphi 0, %s113
    %s133 = sphi 0, %s135
    %s136 = sphi 0, %s133
    %s137 = sphi 0, %s136
    %s153 = sphi 0, %s137
    %s159 = sphi 0, %s161
    %s162 = sphi 0, %s159
    %s163 = sphi 0, %s162
    %s179 = sphi 0, %s163
  $region4: #{double_conv.4} parent=0 // loop_header_branch
    %16 = sbr.rel (%p14) target = $region8
  $region5: #{double_conv.4} parent=0 // loop_body
    %s18 = ssub.s32 %s13, 1
    %s19 = ssub.s32 %s13, 2
    %s20 = sadd.s32 %s13, 1
    %s21 = ssub.s32 %s13, %s20
    %p22 = scmp.eq.s32.totalorder %s21, 0
    %s24 = sadd.s32 %s23, 1
    %s25 = scalar_select %p22, %s23, %s24
    %p28 = pneg %p22
    %p29 = scmp.eq.s32.totalorder %s13, 1
    %p30 = por %p28, %p29
    %p31 = scmp.ne.s32.totalorder %s23, %s26
    %p32 = scmp.eq.s32.totalorder %s13, 0
    %p33 = por %p31, %p32
    %p34 = scmp.ne.s32.totalorder %s23, %s26
    %p35 = scmp.eq.s32.totalorder %s18, 1
    %p36 = por %p34, %p35
    %p37 = scmp.ne.s32.totalorder %s26, %s27
    %p38 = scmp.eq.s32.totalorder %s18, 0
    %p39 = por %p37, %p38
    %p40 = scmp.ne.s32.totalorder %s26, %s27
    %p41 = scmp.eq.s32.totalorder %s19, 1
    %p42 = por %p40, %p41
    %p44 = scmp.ne.s32.totalorder %s27, %s43
    %p45 = scmp.eq.s32.totalorder %s19, 0
    %p46 = por %p44, %p45
    %s48 = sadd.s32 %s47, 1
    %p51 = scmp.eq.s32.totalorder %s13, 1
    %p52 = scmp.ne.s32.totalorder %s47, %s49
    %p53 = scmp.eq.s32.totalorder %s13, 0
    %p54 = por %p52, %p53
    %p55 = scmp.ne.s32.totalorder %s47, %s49
    %p56 = scmp.eq.s32.totalorder %s18, 1
    %p57 = por %p55, %p56
    %p58 = scmp.ne.s32.totalorder %s49, %s50
    %p59 = scmp.eq.s32.totalorder %s18, 0
    %p60 = por %p58, %p59
    %p61 = scmp.ne.s32.totalorder %s49, %s50
    %p62 = scmp.eq.s32.totalorder %s19, 1
    %p63 = por %p61, %p62
    %p65 = scmp.ne.s32.totalorder %s50, %s64
    %p66 = scmp.eq.s32.totalorder %s19, 0
    %p67 = por %p65, %p66
    %s69 = sadd.s32 %s68, 1
    %p72 = scmp.eq.s32.totalorder %s13, 1
    %p73 = scmp.ne.s32.totalorder %s68, %s70
    %p74 = scmp.eq.s32.totalorder %s13, 0
    %p75 = por %p73, %p74
    %p76 = scmp.ne.s32.totalorder %s68, %s70
    %p77 = scmp.eq.s32.totalorder %s18, 1
    %p78 = por %p76, %p77
    %p79 = scmp.ne.s32.totalorder %s70, %s71
    %p80 = scmp.eq.s32.totalorder %s18, 0
    %p81 = por %p79, %p80
    %p82 = scmp.ne.s32.totalorder %s70, %s71
    %p83 = scmp.eq.s32.totalorder %s19, 1
    %p84 = por %p82, %p83
    %p86 = scmp.ne.s32.totalorder %s71, %s85
    %p87 = scmp.eq.s32.totalorder %s19, 0
    %p88 = por %p86, %p87
    %s90 = sadd.s32 %s89, 1
    %p93 = scmp.eq.s32.totalorder %s13, 1
    %p94 = scmp.ne.s32.totalorder %s89, %s91
    %p95 = scmp.eq.s32.totalorder %s13, 0
    %p96 = por %p94, %p95
    %p97 = scmp.ne.s32.totalorder %s89, %s91
    %p98 = scmp.eq.s32.totalorder %s18, 1
    %p99 = por %p97, %p98
    %p100 = scmp.ne.s32.totalorder %s91, %s92
    %p101 = scmp.eq.s32.totalorder %s18, 0
    %p102 = por %p100, %p101
    %p103 = scmp.ne.s32.totalorder %s91, %s92
    %p104 = scmp.eq.s32.totalorder %s19, 1
    %p105 = por %p103, %p104
    %p107 = scmp.ne.s32.totalorder %s92, %s106
    %p108 = scmp.eq.s32.totalorder %s19, 0
    %p109 = por %p107, %p108
    %s111 = sadd.s32 %s110, 1
    %p114 = scmp.eq.s32.totalorder %s13, 1
    %p115 = scmp.ne.s32.totalorder %s110, %s112
    %p116 = scmp.eq.s32.totalorder %s13, 0
    %p117 = por %p115, %p116
    %p118 = scmp.ne.s32.totalorder %s110, %s112
    %p119 = scmp.eq.s32.totalorder %s18, 1
    %p120 = por %p118, %p119
    %p121 = scmp.ne.s32.totalorder %s112, %s113
    %p122 = scmp.eq.s32.totalorder %s18, 0
    %p123 = por %p121, %p122
    %p124 = scmp.ne.s32.totalorder %s112, %s113
    %p125 = scmp.eq.s32.totalorder %s19, 1
    %p126 = por %p124, %p125
    %p128 = scmp.ne.s32.totalorder %s113, %s127
    %p129 = scmp.eq.s32.totalorder %s19, 0
    %p130 = por %p128, %p129
    %s131 = ssub.s32 %s13, %s20
    %p132 = scmp.eq.s32.totalorder %s131, 0
    %s134 = sadd.s32 %s133, 1
    %s135 = scalar_select %p132, %s133, %s134
    %p138 = pneg %p132
    %p139 = scmp.eq.s32.totalorder %s13, 1
    %p140 = por %p138, %p139
    %p141 = scmp.ne.s32.totalorder %s133, %s136
    %p142 = scmp.eq.s32.totalorder %s13, 0
    %p143 = por %p141, %p142
    %p144 = scmp.ne.s32.totalorder %s133, %s136
    %p145 = scmp.eq.s32.totalorder %s18, 1
    %p146 = por %p144, %p145
    %p147 = scmp.ne.s32.totalorder %s136, %s137
    %p148 = scmp.eq.s32.totalorder %s18, 0
    %p149 = por %p147, %p148
    %p150 = scmp.ne.s32.totalorder %s136, %s137
    %p151 = scmp.eq.s32.totalorder %s19, 1
    %p152 = por %p150, %p151
    %p154 = scmp.ne.s32.totalorder %s137, %s153
    %p155 = scmp.eq.s32.totalorder %s19, 0
    %p156 = por %p154, %p155
    %s157 = ssub.s32 %s13, %s20
    %p158 = scmp.eq.s32.totalorder %s157, 0
    %s160 = sadd.s32 %s159, 1
    %s161 = scalar_select %p158, %s159, %s160
    %p164 = pneg %p158
    %p165 = scmp.eq.s32.totalorder %s13, 1
    %p166 = por %p164, %p165
    %p167 = scmp.ne.s32.totalorder %s159, %s162
    %p168 = scmp.eq.s32.totalorder %s13, 0
    %p169 = por %p167, %p168
    %p170 = scmp.ne.s32.totalorder %s159, %s162
    %p171 = scmp.eq.s32.totalorder %s18, 1
    %p172 = por %p170, %p171
    %p173 = scmp.ne.s32.totalorder %s162, %s163
    %p174 = scmp.eq.s32.totalorder %s18, 0
    %p175 = por %p173, %p174
    %p176 = scmp.ne.s32.totalorder %s162, %s163
    %p177 = scmp.eq.s32.totalorder %s19, 1
    %p178 = por %p176, %p177
    %p180 = scmp.ne.s32.totalorder %s163, %s179
    %p181 = scmp.eq.s32.totalorder %s19, 0
    %p182 = por %p180, %p181
    %p183 = scmp.le.s32.totalorder 1, %s13
    %p184 = scmp.lt.s32.totalorder %s13, 3
    %p185 = pnand %p183, %p184
    %p186 = pneg %p185
    // Predicated region
    $region9: #{double_conv.4} parent=5 // pred_check
      _
    $region10: #{double_conv.4} parent=5 // pred_check_branch
      %188 = sbr.rel (%p185) target = $region12
    $region11: #{double_conv.4} parent=5 // pred_region
      %s189 = ssub.s32 %s13, 1
      // Predicated region
      $region13: #{double_conv.4} parent=11 // pred_check
        %p190 = pneg %p60
      $region14: #{double_conv.4} parent=11 // pred_check_branch
        %192 = sbr.rel (%p190) target = $region16
      $region15: #{double_conv.4} parent=11 // pred_region
        _
      $region16: #{double_conv.4} parent=11 // pred_fallthru
        _
      // Predicated region
      $region17: #{double_conv.4} parent=11 // pred_check
        %p193 = pneg %p81
      $region18: #{double_conv.4} parent=11 // pred_check_branch
        %195 = sbr.rel (%p193) target = $region20
      $region19: #{double_conv.4} parent=11 // pred_region
        _
      $region20: #{double_conv.4} parent=11 // pred_fallthru
        _
      // Predicated region
      $region21: #{double_conv.4} parent=11 // pred_check
        %p196 = pneg %p102
      $region22: #{double_conv.4} parent=11 // pred_check_branch
        %198 = sbr.rel (%p196) target = $region24
      $region23: #{double_conv.4} parent=11 // pred_region
        _
      $region24: #{double_conv.4} parent=11 // pred_fallthru
        _
      // Predicated region
      $region25: #{double_conv.4} parent=11 // pred_check
        %p199 = pneg %p123
      $region26: #{double_conv.4} parent=11 // pred_check_branch
        %201 = sbr.rel (%p199) target = $region28
      $region27: #{double_conv.4} parent=11 // pred_region
        _
      $region28: #{double_conv.4} parent=11 // pred_fallthru
        _
    $region12: #{double_conv.4} parent=5 // pred_fallthru
      _
    %p202 = scmp.lt.s32.totalorder %s13, 2
    // Predicated region
    $region29: #{double_conv.4} parent=5 // pred_check
      %p203 = pneg %p202
    $region30: #{double_conv.4} parent=5 // pred_check_branch
      %205 = sbr.rel (%p203) target = $region32
    $region31: #{double_conv.4} parent=5 // pred_region
      // Predicated region
      $region33: #{double_conv.4} parent=31 // pred_check
        %p206 = pneg %p33
      $region34: #{double_conv.4} parent=31 // pred_check_branch
        %208 = sbr.rel (%p206) target = $region36
      $region35: #{double_conv.4} parent=31 // pred_region
        %p209 = scmp.lt.s32.totalorder %s13, 1
        %s210 = scalar_select %p209, %s13, 1
        %s211 = smul.addr %s210, 2
        %s212 = smul.addr %s211, 8
        %s213 = scalar_lea.vmem %s0, %s212
      $region36: #{double_conv.4} parent=31 // pred_fallthru
        _
    $region32: #{double_conv.4} parent=5 // pred_fallthru
      _
    %p214 = scmp.le.s32.totalorder 1, %s13
    %p215 = scmp.lt.s32.totalorder %s13, 3
    %p216 = pnand %p214, %p215
    %p217 = pneg %p216
    // Predicated region
    $region37: #{double_conv.4} parent=5 // pred_check
      _
    $region38: #{double_conv.4} parent=5 // pred_check_branch
      %219 = sbr.rel (%p216) target = $region40
    $region39: #{double_conv.4} parent=5 // pred_region
      %s220 = ssub.s32 %s13, 1
      %p221 = scmp.lt.s32.totalorder %s18, 1
      %s222 = scalar_select %p221, %s18, 1
      %s223 = smul.addr %s222, 2
      %s224 = smul.addr %s223, 8
      %s225 = scalar_lea.vmem %s0, %s224
      %p226 = pneg %p39
      %p227 = pneg %p36
      %p228 = pneg %p60
      %p229 = pneg %p57
      %p230 = pneg %p81
      %p231 = pneg %p78
      %p232 = pneg %p102
      %p233 = pneg %p99
      %p234 = pneg %p123
      %p235 = pneg %p120
      %p236 = pneg %p149
      %p237 = pneg %p146
      %p238 = scmp.lt.s32.totalorder %s18, 1
      %s239 = scalar_select %p238, %s18, 1
      %s240 = smul.addr %s239, 2
      %s241 = smul.addr %s240, 8
      %s242 = scalar_lea.vmem %s5, %s241
      %p243 = pneg %p175
      %p244 = pneg %p172
      %p245 = scmp.lt.s32.totalorder %s18, 1
      %s246 = scalar_select %p245, %s18, 1
      %s247 = smul.addr %s246, 2
      %s248 = smul.addr %s247, 8
      %s249 = scalar_lea.vmem %s6, %s248
      %p250 = scmp.lt.s32.totalorder %s18, 1
      %s251 = scalar_select %p250, %s18, 1
      %s252 = smul.addr %s251, 2
      %s253 = smul.addr %s252, 8
      %s254 = scalar_lea.vmem %s0, %s253
      %p255 = scmp.lt.s32.totalorder %s18, 1
      %s256 = scalar_select %p255, %s18, 1
      %s257 = smul.addr %s256, 2
      %s258 = smul.addr %s257, 8
      %s259 = scalar_lea.vmem %s5, %s258
      %p260 = scmp.lt.s32.totalorder %s18, 1
      %s261 = scalar_select %p260, %s18, 1
      %s262 = smul.addr %s261, 2
      %s263 = smul.addr %s262, 8
      %s264 = scalar_lea.vmem %s6, %s263
      %v265 = vld [vmem:[%s254] sm:$0xff]
      %v266 = vld [vmem:[%s254 + $0x8] sm:$0xff]
      %v267 = vld [vmem:[%s1] sm:$0xff]
      %269 = vset.pattern.permute.xlu0 0
      %270 = vperm.xlu0 %269, %v267
      %v271 = vpop.permute.xlu0 %270
      %v273 = vmul.f32 %v265, %v271
      %v274 = vmul.f32 %v266, %v271
      %v275 = vld [vmem:[%s2] sm:$0xff]
      %277 = vset.pattern.permute.xlu0 0
      %278 = vperm.xlu0 %277, %v275
      %v279 = vpop.permute.xlu0 %278
      %v281 = vadd.f32 %v273, %v279
      %v282 = vadd.f32 %v274, %v279
      %v283 = vmax.f32 %v281, 0.0
      %v284 = vmax.f32 %v282, 0.0
      %285 = vrot.lane.b32.xlu0 %v283, 17
      %v286 = vpop.permute.xlu0 %285
      %287 = vrot.lane.b32.xlu0 %v284, 17
      %v288 = vpop.permute.xlu0 %287
      %v289 = vlaneseq
      %v290 = vand.u32 %v289, 127
      %vm291 = vcmp.lt.s32.totalorder %v290, 17
      %v292 = vsel %vm291, %v286, %v288
      %v293 = vsel %vm291, %v288, %v286
      %v294 = vld [vmem:[%s4] ss:$8 sm:$0x3]
      %v296 = vperm.slane %v294, 0
      %v297 = vperm.slane %v294, 1
      %v300 = vmul.f32 %v293, %v296
      %v301 = vmul.f32 %v292, %v297
      %v302 = vld [vmem:[%s3] sm:$0xff]
      %303 = vrot.lane.b32.xlu0 %v283, 16
      %v304 = vpop.permute.xlu0 %303
      %305 = vrot.lane.b32.xlu0 %v284, 16
      %v306 = vpop.permute.xlu0 %305
      %vm307 = vcmp.lt.s32.totalorder %v290, 16
      %v308 = vsel %vm307, %v304, %v306
      %v309 = vsel %vm307, %v306, %v304
      %s310 = scalar_lea.vmem %s4, 1
      %v311 = vld [vmem:[%s310] ss:$8 sm:$0x3]
      %v313 = vperm.slane %v311, 0
      %v314 = vperm.slane %v311, 1
      %v317 = vmul.f32 %v309, %v313
      %v318 = vmul.f32 %v308, %v314
      %s319 = scalar_lea.vmem %s3, 8
      %v320 = vld [vmem:[%s319] sm:$0xff]
      %vm321 = vcmask 64512
      %v323 = vsel %vm321, %v320, 0
      %325 = vmatpush.msra.mxu0 0.0
      %326 = vmatpush.msra.mxu0 0.0
      %327 = vmatpush.msra.mxu0 0.0
      %328 = vmatpush.msra.mxu0 0.0
      %329 = vmatpush.msra.mxu0 0.0
      %330 = vmatpush.msra.mxu0 0.0
      %331 = vmatpush.msra.mxu0 0.0
      %332 = vmatpush.msra.mxu0 0.0
      %333 = vmatpush.msra.mxu0 0.0
      %334 = vmatpush.msra.mxu0 0.0
      %335 = vmatpush.msra.mxu0 0.0
      %336 = vmatpush.msra.mxu0 0.0
      %337 = vmatpush.msra.mxu0 0.0
      %338 = vmatpush.msra.mxu0 0.0
      %339 = vmatpush.msra.mxu0 0.0
      %340 = vmatpush.msra.mxu0 %v317
      %341 = vmatmul.f32.gmra.mxu0 %v323
      %v342 = vpop.f32.mrf.mxu0
      %v343 = vadd.f32 0.0, %v342
      %344 = vdwg.mxu0
      %345 = vmatpush.msra.mxu0 0.0
      %346 = vmatpush.msra.mxu0 0.0
      %347 = vmatpush.msra.mxu0 0.0
      %348 = vmatpush.msra.mxu0 0.0
      %349 = vmatpush.msra.mxu0 0.0
      %350 = vmatpush.msra.mxu0 0.0
      %351 = vmatpush.msra.mxu0 0.0
      %352 = vmatpush.msra.mxu0 0.0
      %353 = vmatpush.msra.mxu0 0.0
      %354 = vmatpush.msra.mxu0 0.0
      %355 = vmatpush.msra.mxu0 0.0
      %356 = vmatpush.msra.mxu0 0.0
      %357 = vmatpush.msra.mxu0 0.0
      %358 = vmatpush.msra.mxu0 0.0
      %359 = vmatpush.msra.mxu0 0.0
      %360 = vmatpush.msra.mxu0 %v318
      %361 = vmatmul.f32.gmra.mxu0 %v323
      %v362 = vpop.f32.mrf.mxu0
      %v363 = vadd.f32 0.0, %v362
      %364 = vdwg.mxu0
      %v366 = vsel %vm321, %v302, 0
      %368 = vmatpush.msra.mxu0 0.0
      %369 = vmatpush.msra.mxu0 0.0
      %370 = vmatpush.msra.mxu0 0.0
      %371 = vmatpush.msra.mxu0 0.0
      %372 = vmatpush.msra.mxu0 0.0
      %373 = vmatpush.msra.mxu0 0.0
      %374 = vmatpush.msra.mxu0 0.0
      %375 = vmatpush.msra.mxu0 0.0
      %376 = vmatpush.msra.mxu0 0.0
      %377 = vmatpush.msra.mxu0 0.0
      %378 = vmatpush.msra.mxu0 0.0
      %379 = vmatpush.msra.mxu0 0.0
      %380 = vmatpush.msra.mxu0 0.0
      %381 = vmatpush.msra.mxu0 0.0
      %382 = vmatpush.msra.mxu0 0.0
      %383 = vmatpush.msra.mxu0 %v300
      %384 = vmatmul.f32.gmra.mxu0 %v366
      %v385 = vpop.f32.mrf.mxu0
      %v386 = vadd.f32 %v343, %v385
      %387 = vdwg.mxu0
      %388 = vmatpush.msra.mxu0 0.0
      %389 = vmatpush.msra.mxu0 0.0
      %390 = vmatpush.msra.mxu0 0.0
      %391 = vmatpush.msra.mxu0 0.0
      %392 = vmatpush.msra.mxu0 0.0
      %393 = vmatpush.msra.mxu0 0.0
      %394 = vmatpush.msra.mxu0 0.0
      %395 = vmatpush.msra.mxu0 0.0
      %396 = vmatpush.msra.mxu0 0.0
      %397 = vmatpush.msra.mxu0 0.0
      %398 = vmatpush.msra.mxu0 0.0
      %399 = vmatpush.msra.mxu0 0.0
      %400 = vmatpush.msra.mxu0 0.0
      %401 = vmatpush.msra.mxu0 0.0
      %402 = vmatpush.msra.mxu0 0.0
      %403 = vmatpush.msra.mxu0 %v301
      %404 = vmatmul.f32.gmra.mxu0 %v366
      %v405 = vpop.f32.mrf.mxu0
      %v406 = vadd.f32 %v363, %v405
      %407 = vdwg.mxu0
      %408 = vrot.lane.b32.xlu0 %v283, 15
      %v409 = vpop.permute.xlu0 %408
      %410 = vrot.lane.b32.xlu0 %v284, 15
      %v411 = vpop.permute.xlu0 %410
      %vm412 = vcmp.lt.s32.totalorder %v290, 15
      %v413 = vsel %vm412, %v409, %v411
      %v414 = vsel %vm412, %v411, %v409
      %s415 = scalar_lea.vmem %s4, 2
      %v416 = vld [vmem:[%s415] ss:$8 sm:$0x3]
      %v418 = vperm.slane %v416, 0
      %v419 = vperm.slane %v416, 1
      %v422 = vmul.f32 %v414, %v418
      %v423 = vmul.f32 %v413, %v419
      %s424 = scalar_lea.vmem %s3, 16
      %v425 = vld [vmem:[%s424] sm:$0xff]
      %v427 = vsel %vm321, %v425, 0
      %429 = vmatpush.msra.mxu0 0.0
      %430 = vmatpush.msra.mxu0 0.0
      %431 = vmatpush.msra.mxu0 0.0
      %432 = vmatpush.msra.mxu0 0.0
      %433 = vmatpush.msra.mxu0 0.0
      %434 = vmatpush.msra.mxu0 0.0
      %435 = vmatpush.msra.mxu0 0.0
      %436 = vmatpush.msra.mxu0 0.0
      %437 = vmatpush.msra.mxu0 0.0
      %438 = vmatpush.msra.mxu0 0.0
      %439 = vmatpush.msra.mxu0 0.0
      %440 = vmatpush.msra.mxu0 0.0
      %441 = vmatpush.msra.mxu0 0.0
      %442 = vmatpush.msra.mxu0 0.0
      %443 = vmatpush.msra.mxu0 0.0
      %444 = vmatpush.msra.mxu0 %v422
      %445 = vmatmul.f32.gmra.mxu0 %v427
      %v446 = vpop.f32.mrf.mxu0
      %v447 = vadd.f32 0.0, %v446
      %448 = vdwg.mxu0
      %449 = vmatpush.msra.mxu0 0.0
      %450 = vmatpush.msra.mxu0 0.0
      %451 = vmatpush.msra.mxu0 0.0
      %452 = vmatpush.msra.mxu0 0.0
      %453 = vmatpush.msra.mxu0 0.0
      %454 = vmatpush.msra.mxu0 0.0
      %455 = vmatpush.msra.mxu0 0.0
      %456 = vmatpush.msra.mxu0 0.0
      %457 = vmatpush.msra.mxu0 0.0
      %458 = vmatpush.msra.mxu0 0.0
      %459 = vmatpush.msra.mxu0 0.0
      %460 = vmatpush.msra.mxu0 0.0
      %461 = vmatpush.msra.mxu0 0.0
      %462 = vmatpush.msra.mxu0 0.0
      %463 = vmatpush.msra.mxu0 0.0
      %464 = vmatpush.msra.mxu0 %v423
      %465 = vmatmul.f32.gmra.mxu0 %v427
      %v466 = vpop.f32.mrf.mxu0
      %v467 = vadd.f32 0.0, %v466
      %468 = vdwg.mxu0
      %v469 = vadd.f32 %v386, %v447
      %v470 = vadd.f32 %v406, %v467
      %471 = vrot.lane.b32.xlu0 %v283, 1
      %v472 = vpop.permute.xlu0 %471
      %473 = vrot.lane.b32.xlu0 %v284, 1
      %v474 = vpop.permute.xlu0 %473
      %vm475 = vcmp.lt.s32.totalorder %v290, 1
      %v476 = vsel %vm475, %v472, %v474
      %v477 = vsel %vm475, %v474, %v472
      %s478 = scalar_lea.vmem %s4, 3
      %v479 = vld [vmem:[%s478] ss:$8 sm:$0x3]
      %v481 = vperm.slane %v479, 0
      %v482 = vperm.slane %v479, 1
      %v485 = vmul.f32 %v477, %v481
      %v486 = vmul.f32 %v476, %v482
      %s487 = scalar_lea.vmem %s3, 24
      %v488 = vld [vmem:[%s487] sm:$0xff]
      %v490 = vsel %vm321, %v488, 0
      %492 = vmatpush.msra.mxu0 0.0
      %493 = vmatpush.msra.mxu0 0.0
      %494 = vmatpush.msra.mxu0 0.0
      %495 = vmatpush.msra.mxu0 0.0
      %496 = vmatpush.msra.mxu0 0.0
      %497 = vmatpush.msra.mxu0 0.0
      %498 = vmatpush.msra.mxu0 0.0
      %499 = vmatpush.msra.mxu0 0.0
      %500 = vmatpush.msra.mxu0 0.0
      %501 = vmatpush.msra.mxu0 0.0
      %502 = vmatpush.msra.mxu0 0.0
      %503 = vmatpush.msra.mxu0 0.0
      %504 = vmatpush.msra.mxu0 0.0
      %505 = vmatpush.msra.mxu0 0.0
      %506 = vmatpush.msra.mxu0 0.0
      %507 = vmatpush.msra.mxu0 %v485
      %508 = vmatmul.f32.gmra.mxu0 %v490
      %v509 = vpop.f32.mrf.mxu0
      %v510 = vadd.f32 0.0, %v509
      %511 = vdwg.mxu0
      %512 = vmatpush.msra.mxu0 0.0
      %513 = vmatpush.msra.mxu0 0.0
      %514 = vmatpush.msra.mxu0 0.0
      %515 = vmatpush.msra.mxu0 0.0
      %516 = vmatpush.msra.mxu0 0.0
      %517 = vmatpush.msra.mxu0 0.0
      %518 = vmatpush.msra.mxu0 0.0
      %519 = vmatpush.msra.mxu0 0.0
      %520 = vmatpush.msra.mxu0 0.0
      %521 = vmatpush.msra.mxu0 0.0
      %522 = vmatpush.msra.mxu0 0.0
      %523 = vmatpush.msra.mxu0 0.0
      %524 = vmatpush.msra.mxu0 0.0
      %525 = vmatpush.msra.mxu0 0.0
      %526 = vmatpush.msra.mxu0 0.0
      %527 = vmatpush.msra.mxu0 %v486
      %528 = vmatmul.f32.gmra.mxu0 %v490
      %v529 = vpop.f32.mrf.mxu0
      %v530 = vadd.f32 0.0, %v529
      %531 = vdwg.mxu0
      %v532 = vadd.f32 %v469, %v510
      %v533 = vadd.f32 %v470, %v530
      %s534 = scalar_lea.vmem %s3, 32
      %v535 = vld [vmem:[%s534] sm:$0xff]
      %v537 = vsel %vm321, %v535, 0
      %539 = vmatpush.msra.mxu0 0.0
      %540 = vmatpush.msra.mxu0 0.0
      %541 = vmatpush.msra.mxu0 0.0
      %542 = vmatpush.msra.mxu0 0.0
      %543 = vmatpush.msra.mxu0 0.0
      %544 = vmatpush.msra.mxu0 0.0
      %545 = vmatpush.msra.mxu0 0.0
      %546 = vmatpush.msra.mxu0 0.0
      %547 = vmatpush.msra.mxu0 0.0
      %548 = vmatpush.msra.mxu0 0.0
      %549 = vmatpush.msra.mxu0 0.0
      %550 = vmatpush.msra.mxu0 0.0
      %551 = vmatpush.msra.mxu0 0.0
      %552 = vmatpush.msra.mxu0 0.0
      %553 = vmatpush.msra.mxu0 0.0
      %554 = vmatpush.msra.mxu0 %v283
      %555 = vmatmul.f32.gmra.mxu0 %v537
      %v556 = vpop.f32.mrf.mxu0
      %v557 = vadd.f32 0.0, %v556
      %558 = vdwg.mxu0
      %559 = vmatpush.msra.mxu0 0.0
      %560 = vmatpush.msra.mxu0 0.0
      %561 = vmatpush.msra.mxu0 0.0
      %562 = vmatpush.msra.mxu0 0.0
      %563 = vmatpush.msra.mxu0 0.0
      %564 = vmatpush.msra.mxu0 0.0
      %565 = vmatpush.msra.mxu0 0.0
      %566 = vmatpush.msra.mxu0 0.0
      %567 = vmatpush.msra.mxu0 0.0
      %568 = vmatpush.msra.mxu0 0.0
      %569 = vmatpush.msra.mxu0 0.0
      %570 = vmatpush.msra.mxu0 0.0
      %571 = vmatpush.msra.mxu0 0.0
      %572 = vmatpush.msra.mxu0 0.0
      %573 = vmatpush.msra.mxu0 0.0
      %574 = vmatpush.msra.mxu0 %v284
      %575 = vmatmul.f32.gmra.mxu0 %v537
      %v576 = vpop.f32.mrf.mxu0
      %v577 = vadd.f32 0.0, %v576
      %578 = vdwg.mxu0
      %v579 = vadd.f32 %v532, %v557
      %v580 = vadd.f32 %v533, %v577
      %581 = vrot.lane.b32.xlu0 %v283, 127
      %v582 = vpop.permute.xlu0 %581
      %583 = vrot.lane.b32.xlu0 %v284, 127
      %v584 = vpop.permute.xlu0 %583
      %vm585 = vcmp.lt.s32.totalorder %v290, 127
      %v586 = vsel %vm585, %v582, %v584
      %v587 = vsel %vm585, %v584, %v582
      %s588 = scalar_lea.vmem %s4, 5
      %v589 = vld [vmem:[%s588] ss:$8 sm:$0x3]
      %v591 = vperm.slane %v589, 0
      %v592 = vperm.slane %v589, 1
      %v595 = vmul.f32 %v586, %v591
      %v596 = vmul.f32 %v587, %v592
      %s597 = scalar_lea.vmem %s3, 40
      %v598 = vld [vmem:[%s597] sm:$0xff]
      %v600 = vsel %vm321, %v598, 0
      %602 = vmatpush.msra.mxu0 0.0
      %603 = vmatpush.msra.mxu0 0.0
      %604 = vmatpush.msra.mxu0 0.0
      %605 = vmatpush.msra.mxu0 0.0
      %606 = vmatpush.msra.mxu0 0.0
      %607 = vmatpush.msra.mxu0 0.0
      %608 = vmatpush.msra.mxu0 0.0
      %609 = vmatpush.msra.mxu0 0.0
      %610 = vmatpush.msra.mxu0 0.0
      %611 = vmatpush.msra.mxu0 0.0
      %612 = vmatpush.msra.mxu0 0.0
      %613 = vmatpush.msra.mxu0 0.0
      %614 = vmatpush.msra.mxu0 0.0
      %615 = vmatpush.msra.mxu0 0.0
      %616 = vmatpush.msra.mxu0 0.0
      %617 = vmatpush.msra.mxu0 %v595
      %618 = vmatmul.f32.gmra.mxu0 %v600
      %v619 = vpop.f32.mrf.mxu0
      %v620 = vadd.f32 0.0, %v619
      %621 = vdwg.mxu0
      %622 = vmatpush.msra.mxu0 0.0
      %623 = vmatpush.msra.mxu0 0.0
      %624 = vmatpush.msra.mxu0 0.0
      %625 = vmatpush.msra.mxu0 0.0
      %626 = vmatpush.msra.mxu0 0.0
      %627 = vmatpush.msra.mxu0 0.0
      %628 = vmatpush.msra.mxu0 0.0
      %629 = vmatpush.msra.mxu0 0.0
      %630 = vmatpush.msra.mxu0 0.0
      %631 = vmatpush.msra.mxu0 0.0
      %632 = vmatpush.msra.mxu0 0.0
      %633 = vmatpush.msra.mxu0 0.0
      %634 = vmatpush.msra.mxu0 0.0
      %635 = vmatpush.msra.mxu0 0.0
      %636 = vmatpush.msra.mxu0 0.0
      %637 = vmatpush.msra.mxu0 %v596
      %638 = vmatmul.f32.gmra.mxu0 %v600
      %v639 = vpop.f32.mrf.mxu0
      %v640 = vadd.f32 0.0, %v639
      %641 = vdwg.mxu0
      %v642 = vadd.f32 %v579, %v620
      %v643 = vadd.f32 %v580, %v640
      %644 = vrot.lane.b32.xlu0 %v283, 113
      %v645 = vpop.permute.xlu0 %644
      %646 = vrot.lane.b32.xlu0 %v284, 113
      %v647 = vpop.permute.xlu0 %646
      %vm648 = vcmp.lt.s32.totalorder %v290, 113
      %v649 = vsel %vm648, %v645, %v647
      %v650 = vsel %vm648, %v647, %v645
      %s651 = scalar_lea.vmem %s4, 6
      %v652 = vld [vmem:[%s651] ss:$8 sm:$0x3]
      %v654 = vperm.slane %v652, 0
      %v655 = vperm.slane %v652, 1
      %v658 = vmul.f32 %v649, %v654
      %v659 = vmul.f32 %v650, %v655
      %s660 = scalar_lea.vmem %s3, 48
      %v661 = vld [vmem:[%s660] sm:$0xff]
      %v663 = vsel %vm321, %v661, 0
      %665 = vmatpush.msra.mxu0 0.0
      %666 = vmatpush.msra.mxu0 0.0
      %667 = vmatpush.msra.mxu0 0.0
      %668 = vmatpush.msra.mxu0 0.0
      %669 = vmatpush.msra.mxu0 0.0
      %670 = vmatpush.msra.mxu0 0.0
      %671 = vmatpush.msra.mxu0 0.0
      %672 = vmatpush.msra.mxu0 0.0
      %673 = vmatpush.msra.mxu0 0.0
      %674 = vmatpush.msra.mxu0 0.0
      %675 = vmatpush.msra.mxu0 0.0
      %676 = vmatpush.msra.mxu0 0.0
      %677 = vmatpush.msra.mxu0 0.0
      %678 = vmatpush.msra.mxu0 0.0
      %679 = vmatpush.msra.mxu0 0.0
      %680 = vmatpush.msra.mxu0 %v658
      %681 = vmatmul.f32.gmra.mxu0 %v663
      %v682 = vpop.f32.mrf.mxu0
      %v683 = vadd.f32 0.0, %v682
      %684 = vdwg.mxu0
      %685 = vmatpush.msra.mxu0 0.0
      %686 = vmatpush.msra.mxu0 0.0
      %687 = vmatpush.msra.mxu0 0.0
      %688 = vmatpush.msra.mxu0 0.0
      %689 = vmatpush.msra.mxu0 0.0
      %690 = vmatpush.msra.mxu0 0.0
      %691 = vmatpush.msra.mxu0 0.0
      %692 = vmatpush.msra.mxu0 0.0
      %693 = vmatpush.msra.mxu0 0.0
      %694 = vmatpush.msra.mxu0 0.0
      %695 = vmatpush.msra.mxu0 0.0
      %696 = vmatpush.msra.mxu0 0.0
      %697 = vmatpush.msra.mxu0 0.0
      %698 = vmatpush.msra.mxu0 0.0
      %699 = vmatpush.msra.mxu0 0.0
      %700 = vmatpush.msra.mxu0 %v659
      %701 = vmatmul.f32.gmra.mxu0 %v663
      %v702 = vpop.f32.mrf.mxu0
      %v703 = vadd.f32 0.0, %v702
      %704 = vdwg.mxu0
      %v705 = vadd.f32 %v642, %v683
      %v706 = vadd.f32 %v643, %v703
      %707 = vrot.lane.b32.xlu0 %v283, 112
      %v708 = vpop.permute.xlu0 %707
      %709 = vrot.lane.b32.xlu0 %v284, 112
      %v710 = vpop.permute.xlu0 %709
      %vm711 = vcmp.lt.s32.totalorder %v290, 112
      %v712 = vsel %vm711, %v708, %v710
      %v713 = vsel %vm711, %v710, %v708
      %s714 = scalar_lea.vmem %s4, 7
      %v715 = vld [vmem:[%s714] ss:$8 sm:$0x3]
      %v717 = vperm.slane %v715, 0
      %v718 = vperm.slane %v715, 1
      %v721 = vmul.f32 %v712, %v717
      %v722 = vmul.f32 %v713, %v718
      %s723 = scalar_lea.vmem %s3, 56
      %v724 = vld [vmem:[%s723] sm:$0xff]
      %v726 = vsel %vm321, %v724, 0
      %728 = vmatpush.msra.mxu0 0.0
      %729 = vmatpush.msra.mxu0 0.0
      %730 = vmatpush.msra.mxu0 0.0
      %731 = vmatpush.msra.mxu0 0.0
      %732 = vmatpush.msra.mxu0 0.0
      %733 = vmatpush.msra.mxu0 0.0
      %734 = vmatpush.msra.mxu0 0.0
      %735 = vmatpush.msra.mxu0 0.0
      %736 = vmatpush.msra.mxu0 0.0
      %737 = vmatpush.msra.mxu0 0.0
      %738 = vmatpush.msra.mxu0 0.0
      %739 = vmatpush.msra.mxu0 0.0
      %740 = vmatpush.msra.mxu0 0.0
      %741 = vmatpush.msra.mxu0 0.0
      %742 = vmatpush.msra.mxu0 0.0
      %743 = vmatpush.msra.mxu0 %v721
      %744 = vmatmul.f32.gmra.mxu0 %v726
      %v745 = vpop.f32.mrf.mxu0
      %v746 = vadd.f32 0.0, %v745
      %747 = vdwg.mxu0
      %748 = vmatpush.msra.mxu0 0.0
      %749 = vmatpush.msra.mxu0 0.0
      %750 = vmatpush.msra.mxu0 0.0
      %751 = vmatpush.msra.mxu0 0.0
      %752 = vmatpush.msra.mxu0 0.0
      %753 = vmatpush.msra.mxu0 0.0
      %754 = vmatpush.msra.mxu0 0.0
      %755 = vmatpush.msra.mxu0 0.0
      %756 = vmatpush.msra.mxu0 0.0
      %757 = vmatpush.msra.mxu0 0.0
      %758 = vmatpush.msra.mxu0 0.0
      %759 = vmatpush.msra.mxu0 0.0
      %760 = vmatpush.msra.mxu0 0.0
      %761 = vmatpush.msra.mxu0 0.0
      %762 = vmatpush.msra.mxu0 0.0
      %763 = vmatpush.msra.mxu0 %v722
      %764 = vmatmul.f32.gmra.mxu0 %v726
      %v765 = vpop.f32.mrf.mxu0
      %v766 = vadd.f32 0.0, %v765
      %767 = vdwg.mxu0
      %v768 = vadd.f32 %v705, %v746
      %v769 = vadd.f32 %v706, %v766
      %770 = vrot.lane.b32.xlu0 %v283, 111
      %v771 = vpop.permute.xlu0 %770
      %772 = vrot.lane.b32.xlu0 %v284, 111
      %v773 = vpop.permute.xlu0 %772
      %vm774 = vcmp.lt.s32.totalorder %v290, 111
      %v775 = vsel %vm774, %v771, %v773
      %v776 = vsel %vm774, %v773, %v771
      %s777 = scalar_lea.vmem %s4, 16
      %v778 = vld [vmem:[%s777] ss:$8 sm:$0x3]
      %v780 = vperm.slane %v778, 0
      %v781 = vperm.slane %v778, 1
      %v784 = vmul.f32 %v775, %v780
      %v785 = vmul.f32 %v776, %v781
      %s786 = scalar_lea.vmem %s3, 64
      %v787 = vld [vmem:[%s786] sm:$0xff]
      %v789 = vsel %vm321, %v787, 0
      %791 = vmatpush.msra.mxu0 0.0
      %792 = vmatpush.msra.mxu0 0.0
      %793 = vmatpush.msra.mxu0 0.0
      %794 = vmatpush.msra.mxu0 0.0
      %795 = vmatpush.msra.mxu0 0.0
      %796 = vmatpush.msra.mxu0 0.0
      %797 = vmatpush.msra.mxu0 0.0
      %798 = vmatpush.msra.mxu0 0.0
      %799 = vmatpush.msra.mxu0 0.0
      %800 = vmatpush.msra.mxu0 0.0
      %801 = vmatpush.msra.mxu0 0.0
      %802 = vmatpush.msra.mxu0 0.0
      %803 = vmatpush.msra.mxu0 0.0
      %804 = vmatpush.msra.mxu0 0.0
      %805 = vmatpush.msra.mxu0 0.0
      %806 = vmatpush.msra.mxu0 %v784
      %807 = vmatmul.f32.gmra.mxu0 %v789
      %v808 = vpop.f32.mrf.mxu0
      %v809 = vadd.f32 0.0, %v808
      %810 = vdwg.mxu0
      %811 = vmatpush.msra.mxu0 0.0
      %812 = vmatpush.msra.mxu0 0.0
      %813 = vmatpush.msra.mxu0 0.0
      %814 = vmatpush.msra.mxu0 0.0
      %815 = vmatpush.msra.mxu0 0.0
      %816 = vmatpush.msra.mxu0 0.0
      %817 = vmatpush.msra.mxu0 0.0
      %818 = vmatpush.msra.mxu0 0.0
      %819 = vmatpush.msra.mxu0 0.0
      %820 = vmatpush.msra.mxu0 0.0
      %821 = vmatpush.msra.mxu0 0.0
      %822 = vmatpush.msra.mxu0 0.0
      %823 = vmatpush.msra.mxu0 0.0
      %824 = vmatpush.msra.mxu0 0.0
      %825 = vmatpush.msra.mxu0 0.0
      %826 = vmatpush.msra.mxu0 %v785
      %827 = vmatmul.f32.gmra.mxu0 %v789
      %v828 = vpop.f32.mrf.mxu0
      %v829 = vadd.f32 0.0, %v828
      %830 = vdwg.mxu0
      %v831 = vadd.f32 %v768, %v809
      %v832 = vadd.f32 %v769, %v829
      %833 = vst [vmem:[%s259] sm:$0xff] %v831
      %834 = vst [vmem:[%s259 + $0x8] sm:$0xff] %v832
      %v835 = vadd.f32 %v831, %v832
      %836 = vadd.xlane.f32.xlu0 %v835
      %v837 = vpop.xlane.xlu0 %836
      %vm838 = vcmask 7168
      %839 = vst.msk [vmem:[%s264] sm:$0xff] %vm838, %v837
      %v840 = vmul.f32 %v831, %v831
      %v841 = vmul.f32 %v832, %v832
      %v842 = vadd.f32 %v840, %v841
      %843 = vadd.xlane.f32.xlu0 %v842
      %v844 = vpop.xlane.xlu0 %843
      %845 = vst.msk [vmem:[%s264 + $0x8] sm:$0xff] %vm838, %v844
      %p846 = scmp.lt.s32.totalorder %s18, 1
      %s847 = scalar_select %p846, %s18, 1
      %s848 = smul.addr %s847, 2
      %s849 = smul.addr %s848, 8
      %s850 = scalar_lea.vmem %s5, %s849
      %p851 = scmp.lt.s32.totalorder %s18, 1
      %s852 = scalar_select %p851, %s18, 1
      %s853 = smul.addr %s852, 2
      %s854 = smul.addr %s853, 8
      %s855 = scalar_lea.vmem %s6, %s854
      // Predicated region
      $region41: #{double_conv.4} parent=39 // pred_check
        %p856 = pneg %p146
      $region42: #{double_conv.4} parent=39 // pred_check_branch
        %858 = sbr.rel (%p856) target = $region44
      $region43: #{double_conv.4} parent=39 // pred_region
        _
      $region44: #{double_conv.4} parent=39 // pred_fallthru
        _
      // Predicated region
      $region45: #{double_conv.4} parent=39 // pred_check
        %p859 = pneg %p172
      $region46: #{double_conv.4} parent=39 // pred_check_branch
        %861 = sbr.rel (%p859) target = $region48
      $region47: #{double_conv.4} parent=39 // pred_region
        _
      $region48: #{double_conv.4} parent=39 // pred_fallthru
        _
    $region40: #{double_conv.4} parent=5 // pred_fallthru
      _
    %p862 = scmp.le.s32.totalorder 2, %s13
    // Predicated region
    $region49: #{double_conv.4} parent=5 // pred_check
      %p863 = pneg %p862
    $region50: #{double_conv.4} parent=5 // pred_check_branch
      %865 = sbr.rel (%p863) target = $region52
    $region51: #{double_conv.4} parent=5 // pred_region
      %s866 = ssub.s32 %s13, 2
      // Predicated region
      $region53: #{double_conv.4} parent=51 // pred_check
        %p867 = pneg %p152
      $region54: #{double_conv.4} parent=51 // pred_check_branch
        %869 = sbr.rel (%p867) target = $region56
      $region55: #{double_conv.4} parent=51 // pred_region
        %p870 = scmp.lt.s32.totalorder %s19, 1
        %s871 = scalar_select %p870, %s19, 1
        %s872 = smul.addr %s871, 2
        %s873 = smul.addr %s872, 8
        %s874 = scalar_lea.vmem %s5, %s873
      $region56: #{double_conv.4} parent=51 // pred_fallthru
        _
      // Predicated region
      $region57: #{double_conv.4} parent=51 // pred_check
        %p875 = pneg %p178
      $region58: #{double_conv.4} parent=51 // pred_check_branch
        %877 = sbr.rel (%p875) target = $region60
      $region59: #{double_conv.4} parent=51 // pred_region
        %p878 = scmp.lt.s32.totalorder %s19, 1
        %s879 = scalar_select %p878, %s19, 1
        %s880 = smul.addr %s879, 2
        %s881 = smul.addr %s880, 8
        %s882 = scalar_lea.vmem %s6, %s881
      $region60: #{double_conv.4} parent=51 // pred_fallthru
        _
    $region52: #{double_conv.4} parent=5 // pred_fallthru
      _
  $region6: #{double_conv.4} parent=0 // loop_footer
    %s17 = sadd.s32 1, %s13
  $region7: #{double_conv.4} parent=0 // loop_footer_branch
    %12 = sbr.rel target = $region3
  $region8: #{double_conv.4} parent=0 // loop_exit
    _

</llo_original>
